<compile_context>
chip_gen: v5e
topology: v5e:2x2
jax: 0.10.0
libtpu: 0.0.40
codegen_flags: <defaults>
</compile_context>

<pallas_src>
import math
import functools

import jax
import jax.numpy as jnp
from jax.experimental import pallas as pl
from jax.experimental.pallas import tpu as pltpu


# --------------------------------------------------------------------------
# Hardware-aware helpers
# --------------------------------------------------------------------------

_DEFAULT_VMEM = 128 * 1024 * 1024


@functools.lru_cache(maxsize=None)
def _vmem_capacity():
    try:
        info = pltpu.get_tpu_info()
        cap = getattr(info, "vmem_capacity_bytes", None)
        if cap:
            return int(cap)
    except Exception:
        pass
    return _DEFAULT_VMEM


def _vmem_limit():
    # 3/4 of physical per-core VMEM: 48 MiB on v7x, 96 MiB on v5e/v6e.
    return min(int(_vmem_capacity() * 3 // 4), 128 * 1024 * 1024)


def _row_target():
    # Bigger row tiles on 128 MiB parts (v5e/v6e); conservative on v7x.
    return 512 if _vmem_capacity() >= 100 * 1024 * 1024 else 256


def _cp(sems):
    """Compiler params: explicit dim semantics + generation-aware VMEM limit."""
    return pltpu.CompilerParams(dimension_semantics=sems,
                                vmem_limit_bytes=_vmem_limit())


def _row_tile(n, target):
    """Largest row tile (multiple of 8, divides n, <= target); prefer >=2 grid
    steps when possible so both v7x TensorCores get work."""
    if n % 8 != 0:
        return n                      # single full block (tiny / ragged case)
    t = min(target, n)
    t -= t % 8
    while n % t != 0:
        t -= 8
    if t == n and n >= 16:
        half = (n // 2) - ((n // 2) % 8)
        if half >= 8 and n % half == 0:
            t = half
    return t


def _ln(x, g, b, eps):
    """f32 LayerNorm over the last dim (g, b are [1, D])."""
    mu = jnp.mean(x, axis=-1, keepdims=True)
    var = jnp.mean(jnp.square(x - mu), axis=-1, keepdims=True)
    return (x - mu) * jax.lax.rsqrt(var + eps) * g + b


def _mha_core(q, k, v, num_heads, head_dim, need_weights):
    """Head-major batched attention core.  A single reshape+transpose gives
    [H, S, hd]; the score / PV matmuls are batched einsums (MXU-friendly, no
    sub-128-lane per-head slicing and no lane-axis concat).  The 1/sqrt(hd)
    scale is pre-folded into the Q projection weights at prep time."""
    sq = q.shape[0]
    sk = k.shape[0]
    qh = jnp.transpose(q.reshape(sq, num_heads, head_dim), (1, 0, 2)).astype(jnp.bfloat16)
    kh = jnp.transpose(k.reshape(sk, num_heads, head_dim), (1, 0, 2)).astype(jnp.bfloat16)
    vh = jnp.transpose(v.reshape(sk, num_heads, head_dim), (1, 0, 2)).astype(jnp.bfloat16)
    s = jnp.einsum("hqd,hkd->hqk", qh, kh, preferred_element_type=jnp.float32)
    p = jax.nn.softmax(s, axis=-1)                                  # [H,Sq,Sk] f32
    ctx = jnp.einsum("hqk,hkd->hqd", p.astype(jnp.bfloat16), vh,
                     preferred_element_type=jnp.float32)            # [H,Sq,hd]
    ctx = jnp.transpose(ctx, (1, 0, 2)).reshape(sq, num_heads * head_dim)
    attw = jnp.mean(p, axis=0) if need_weights else None
    return ctx, attw


# --------------------------------------------------------------------------
# Kernel 1: fused LN(norm1) + self-attention + residual  (grid over batch)
# --------------------------------------------------------------------------

def _self_attn_kernel(x_ref, g_ref, b_ref, wqkv_ref, bqkv_ref, wo_ref, bo_ref,
                      out_ref, attw_ref, *, num_heads, head_dim, eps):
    x = x_ref[0].astype(jnp.float32)                 # [S, D]  (residual)
    d = x.shape[-1]
    xn = _ln(x, g_ref[...], b_ref[...], eps).astype(jnp.bfloat16)
    qkv = jnp.dot(xn, wqkv_ref[...],
                  preferred_element_type=jnp.float32) + bqkv_ref[...]   # [S, 3D]
    q = qkv[:, :d]
    k = qkv[:, d:2 * d]
    v = qkv[:, 2 * d:]
    ctx, attw = _mha_core(q, k, v, num_heads, head_dim, need_weights=True)
    o = jnp.dot(ctx.astype(jnp.bfloat16), wo_ref[...],
                preferred_element_type=jnp.float32) + bo_ref[...]
    out_ref[0] = (x + o).astype(out_ref.dtype)
    attw_ref[0] = attw.astype(attw_ref.dtype)


def self_attention_block(x, p, *, num_heads, eps):
    B, S, D = x.shape
    hd = D // num_heads
    const = lambda shape: pl.BlockSpec(shape, lambda i: (0, 0))
    out, attw = pl.pallas_call(
        functools.partial(_self_attn_kernel, num_heads=num_heads,
                          head_dim=hd, eps=eps),
        grid=(B,),
        in_specs=[pl.BlockSpec((1, S, D), lambda i: (i, 0, 0)),
                  const((1, D)), const((1, D)),
                  const((D, 3 * D)), const((1, 3 * D)),
                  const((D, D)), const((1, D))],
        out_specs=[pl.BlockSpec((1, S, D), lambda i: (i, 0, 0)),
                   pl.BlockSpec((1, S, S), lambda i: (i, 0, 0))],
        out_shape=(jax.ShapeDtypeStruct((B, S, D), jnp.bfloat16),   # bf16 handoff
                   jax.ShapeDtypeStruct((B, S, S), jnp.float32)),   # module output
        compiler_params=_cp(("parallel",)),
    )(x, p["norm1_g"], p["norm1_b"], p["sa_wqkv"], p["sa_bqkv"],
      p["sa_wo"], p["sa_bo"])
    return out, attw


# --------------------------------------------------------------------------
# Kernel 2: fused LN(cross_modal_norm) + cross-attn + modal gate mix
#           (grid over batch; attention weights discarded in the reference)
# --------------------------------------------------------------------------

def _cross_modal_kernel(x_ref, c_ref, g_ref, b_ref, wq_ref, bq_ref, wkv_ref,
                        bkv_ref, wo_ref, bo_ref, gw_ref, gb_ref, out_ref,
                        *, num_heads, head_dim, eps):
    x = x_ref[0].astype(jnp.float32)                 # [S, D]  (residual)
    c = c_ref[0].astype(jnp.bfloat16)                # [Sm, D] raw context (no LN)
    d = x.shape[-1]
    xn = _ln(x, g_ref[...], b_ref[...], eps).astype(jnp.bfloat16)
    q = jnp.dot(xn, wq_ref[...], preferred_element_type=jnp.float32) + bq_ref[...]
    kv = jnp.dot(c, wkv_ref[...], preferred_element_type=jnp.float32) + bkv_ref[...]
    k = kv[:, :d]
    v = kv[:, d:]
    ctx, _ = _mha_core(q, k, v, num_heads, head_dim, need_weights=False)
    fusion = jnp.dot(ctx.astype(jnp.bfloat16), wo_ref[...],
                     preferred_element_type=jnp.float32) + bo_ref[...]
    gate = jax.nn.sigmoid(
        jnp.dot(fusion.astype(jnp.bfloat16), gw_ref[...],
                preferred_element_type=jnp.float32) + gb_ref[...])
    out_ref[0] = (gate * fusion + (1.0 - gate) * x).astype(out_ref.dtype)


def cross_modal_block(x, modal_context, p, *, num_heads, eps):
    B, S, D = x.shape
    Sm = modal_context.shape[1]
    hd = D // num_heads
    const = lambda shape: pl.BlockSpec(shape, lambda i: (0, 0))
    return pl.pallas_call(
        functools.partial(_cross_modal_kernel, num_heads=num_heads,
                          head_dim=hd, eps=eps),
        grid=(B,),
        in_specs=[pl.BlockSpec((1, S, D), lambda i: (i, 0, 0)),
                  pl.BlockSpec((1, Sm, D), lambda i: (i, 0, 0)),
                  const((1, D)), const((1, D)),
                  const((D, D)), const((1, D)),
                  const((D, 2 * D)), const((1, 2 * D)),
                  const((D, D)), const((1, D)),
                  const((D, D)), const((1, D))],
        out_specs=pl.BlockSpec((1, S, D), lambda i: (i, 0, 0)),
        out_shape=jax.ShapeDtypeStruct((B, S, D), jnp.bfloat16),    # bf16 handoff
        compiler_params=_cp(("parallel",)),
    )(x, modal_context, p["cmn_g"], p["cmn_b"],
      p["ca_wq"], p["ca_bq"], p["ca_wkv"], p["ca_bkv"],
      p["ca_wo"], p["ca_bo"], p["gate_w"], p["gate_b"])


# --------------------------------------------------------------------------
# Kernel 3: fused LN(norm2) + concatenated router matmul (row-tiled)
# --------------------------------------------------------------------------

def _ln_router_kernel(x_ref, g_ref, b_ref, wr_ref, br_ref, logits_ref, *, eps):
    x = x_ref[...].astype(jnp.float32)
    xn = _ln(x, g_ref[...], b_ref[...], eps).astype(jnp.bfloat16)
    logits_ref[...] = (jnp.dot(xn, wr_ref[...],
                               preferred_element_type=jnp.float32)
                       + br_ref[...]).astype(logits_ref.dtype)


def ln_router(x2d, p, *, eps):
    N, D = x2d.shape
    Ep = p["router_w"].shape[1]
    T = _row_tile(N, _row_target())
    return pl.pallas_call(
        functools.partial(_ln_router_kernel, eps=eps),
        grid=(N // T,),
        in_specs=[pl.BlockSpec((T, D), lambda i: (i, 0)),
                  pl.BlockSpec((1, D), lambda i: (0, 0)),
                  pl.BlockSpec((1, D), lambda i: (0, 0)),
                  pl.BlockSpec((D, Ep), lambda i: (0, 0)),
                  pl.BlockSpec((1, Ep), lambda i: (0, 0))],
        out_specs=pl.BlockSpec((T, Ep), lambda i: (i, 0)),
        out_shape=jax.ShapeDtypeStruct((N, Ep), jnp.float32),
        compiler_params=_cp(("parallel",)),
    )(x2d, p["norm2_g"], p["norm2_b"], p["router_w"], p["router_b"])


# --------------------------------------------------------------------------
# Kernel 4: fused MoE experts + final FFN
#           grid (row_tiles, experts), VMEM accumulator:
#             acc = residual + sum_e mask_e * Expert_e(LN(x; norm2))
#           final flush (e == E-1): out = acc + FFN(LN(acc; norm3))
# --------------------------------------------------------------------------

def _moe_ffn_kernel(x_ref, ln2g_ref, ln2b_ref, masks_ref,
                    ew1_ref, eb1_ref, ew2_ref, eb2_ref,
                    ln3g_ref, ln3b_ref, fw1_ref, fb1_ref, fw2_ref, fb2_ref,
                    out_ref, acc_ref, *, eps, num_experts):
    e = pl.program_id(1)
    x = x_ref[...].astype(jnp.float32)               # [T, D]

    @pl.when(e == 0)
    def _():
        acc_ref[...] = x                             # init with residual

    xn = _ln(x, ln2g_ref[...], ln2b_ref[...], eps).astype(jnp.bfloat16)
    h = jnp.dot(xn, ew1_ref[0], preferred_element_type=jnp.float32) + eb1_ref[0]
    h = jax.nn.gelu(h, approximate=True)             # hidden stays in VMEM
    eo = jnp.dot(h.astype(jnp.bfloat16), ew2_ref[0],
                 preferred_element_type=jnp.float32) + eb2_ref[0]

    # select this expert's gating column without sub-128 lane blocking
    col = jax.lax.broadcasted_iota(jnp.int32, masks_ref.shape, 1)
    m = jnp.sum(jnp.where(col == e, masks_ref[...], 0.0),
                axis=-1, keepdims=True)              # [T, 1]
    acc_ref[...] += eo * m

    @pl.when(e == num_experts - 1)
    def _():
        y = acc_ref[...]                             # residual + MoE output
        yn = _ln(y, ln3g_ref[...], ln3b_ref[...], eps).astype(jnp.bfloat16)
        hf = jnp.dot(yn, fw1_ref[...], preferred_element_type=jnp.float32) + fb1_ref[...]
        hf = jax.nn.gelu(hf, approximate=True)
        z = jnp.dot(hf.astype(jnp.bfloat16), fw2_ref[...],
                    preferred_element_type=jnp.float32) + fb2_ref[...]
        out_ref[...] = (y + z).astype(out_ref.dtype)


def moe_ffn_block(x2d, masks, p, *, eps):
    N, D = x2d.shape
    E, _, H4 = p["exp_w1"].shape
    T = _row_tile(N, _row_target())
    const = lambda shape: pl.BlockSpec(shape, lambda i, e: (0, 0))
    return pl.pallas_call(
        functools.partial(_moe_ffn_kernel, eps=eps, num_experts=E),
        grid=(N // T, E),
        in_specs=[pl.BlockSpec((T, D), lambda i, e: (i, 0)),
                  const((1, D)), const((1, D)),
                  pl.BlockSpec((T, E), lambda i, e: (i, 0)),
                  pl.BlockSpec((1, D, H4), lambda i, e: (e, 0, 0)),
                  pl.BlockSpec((1, 1, H4), lambda i, e: (e, 0, 0)),
                  pl.BlockSpec((1, H4, D), lambda i, e: (e, 0, 0)),
                  pl.BlockSpec((1, 1, D), lambda i, e: (e, 0, 0)),
                  const((1, D)), const((1, D)),
                  const((D, H4)), const((1, H4)),
                  const((H4, D)), const((1, D))],
        out_specs=pl.BlockSpec((T, D), lambda i, e: (i, 0)),
        out_shape=jax.ShapeDtypeStruct((N, D), jnp.float32),        # module output
        scratch_shapes=[pltpu.VMEM((T, D), jnp.float32)],
        compiler_params=_cp(("parallel", "arbitrary")),
    )(x2d, p["norm2_g"], p["norm2_b"], masks,
      p["exp_w1"], p["exp_b1"], p["exp_w2"], p["exp_b2"],
      p["norm3_g"], p["norm3_b"],
      p["ffn_w1"], p["ffn_b1"], p["ffn_w2"], p["ffn_b2"])


# --------------------------------------------------------------------------
# Plain-JAX glue (top-k routing decision + aux loss on tiny [N, E] logits)
# --------------------------------------------------------------------------

def topk_route(logits, top_k):
    """softmax + top-k gating; Switch-style aux loss; dispatch-fraction usage.
    Dispatch mask is built from top_k indices (exact k experts, no tie-overflow)."""
    probs = jax.nn.softmax(logits, axis=-1)                  # [N, E]
    num_e = logits.shape[-1]
    _, topi = jax.lax.top_k(probs, top_k)                    # [N, k]
    dispatch = jnp.sum(jax.nn.one_hot(topi, num_e, dtype=probs.dtype), axis=-2)
    masks = probs * dispatch
    density = jnp.mean(dispatch, axis=0)
    density_proxy = jnp.mean(probs, axis=0)
    loss = num_e * jnp.sum(density * density_proxy)
    return masks, loss, density


# --------------------------------------------------------------------------
# One-time parameter preparation (hoisted out of the forward pass)
# --------------------------------------------------------------------------

def prepare_params(params, *, num_heads):
    """bf16 casts, QKV fusion (with 1/sqrt(hd) folded into Q), K|V fusion for
    cross-attn, router concat + lane-pad, expert stacking — done once."""
    D = params["norm1_g"].shape[0]
    hd = D // num_heads
    scale = 1.0 / math.sqrt(hd)
    bf = lambda w: w.astype(jnp.bfloat16)
    row = lambda v: v.reshape(1, -1).astype(jnp.float32)

    prep = {}
    for name in ("norm1", "norm2", "norm3", "cmn"):
        prep[f"{name}_g"] = row(params[f"{name}_g"])
        prep[f"{name}_b"] = row(params[f"{name}_b"])

    # self-attention: fused [D, 3D] QKV, attention scale folded into Q weights
    wq = params["sa_wq"] * scale
    bq = params["sa_bq"] * scale
    prep["sa_wqkv"] = bf(jnp.concatenate([wq, params["sa_wk"], params["sa_wv"]], axis=1))
    prep["sa_bqkv"] = jnp.concatenate(
        [bq, params["sa_bk"], params["sa_bv"]]).reshape(1, -1).astype(jnp.float32)
    prep["sa_wo"] = bf(params["sa_wo"])
    prep["sa_bo"] = row(params["sa_bo"])

    # cross-modal attention: Q (scaled) separate, fused [D, 2D] K|V over context
    prep["ca_wq"] = bf(params["ca_wq"] * scale)
    prep["ca_bq"] = row(params["ca_bq"] * scale)
    prep["ca_wkv"] = bf(jnp.concatenate([params["ca_wk"], params["ca_wv"]], axis=1))
    prep["ca_bkv"] = jnp.concatenate(
        [params["ca_bk"], params["ca_bv"]]).reshape(1, -1).astype(jnp.float32)
    prep["ca_wo"] = bf(params["ca_wo"])
    prep["ca_bo"] = row(params["ca_bo"])
    prep["gate_w"] = bf(params["gate_w"])
    prep["gate_b"] = row(params["gate_b"])

    # routers: concatenated, lane-padded to a multiple of 128 output columns
    Es = params["shared_router_w"].shape[1]
    Ei = params["image_router_w"].shape[1]
    wr = jnp.concatenate([params["shared_router_w"], params["image_router_w"]], axis=1)
    br = jnp.concatenate([params["shared_router_b"], params["image_router_b"]])
    Ep = -(-(Es + Ei) // 128) * 128
    prep["router_w"] = bf(jnp.pad(wr, ((0, 0), (0, Ep - Es - Ei))))
    prep["router_b"] = jnp.pad(br, (0, Ep - Es - Ei)).reshape(1, Ep).astype(jnp.float32)

    # experts: stacked [E, ...]
    all_experts = list(params["shared_experts"]) + list(params["image_experts"])
    prep["exp_w1"] = bf(jnp.stack([e["w1"] for e in all_experts]))         # [E, D, 4D]
    prep["exp_b1"] = jnp.stack([e["b1"] for e in all_experts])[:, None, :].astype(jnp.float32)
    prep["exp_w2"] = bf(jnp.stack([e["w2"] for e in all_experts]))         # [E, 4D, D]
    prep["exp_b2"] = jnp.stack([e["b2"] for e in all_experts])[:, None, :].astype(jnp.float32)

    prep["ffn_w1"] = bf(params["ffn_w1"])
    prep["ffn_b1"] = row(params["ffn_b1"])
    prep["ffn_w2"] = bf(params["ffn_w2"])
    prep["ffn_b2"] = row(params["ffn_b2"])
    return prep


# --------------------------------------------------------------------------
# Forward pass
# --------------------------------------------------------------------------

def unified_modal_encoder_forward(prep, x, modal_context, *, num_heads, top_k,
                                  num_shared_experts, num_image_experts,
                                  eps=1e-5):
    B, S, D = x.shape
    N = B * S

    # ---- self-attention block (pre-norm, residual fused in-kernel) ----
    x, attn_w = self_attention_block(x, prep, num_heads=num_heads, eps=eps)

    # ---- cross-modal fusion (LN + cross-attn + gate mix fused) ----
    if modal_context is not None:
        if modal_context.shape[0] != B and modal_context.shape[0] == 10:
            # reference's batch-mismatch fallback: broadcast first row
            modal_context = jnp.broadcast_to(
                modal_context[0:1], (B,) + modal_context.shape[1:])
        x = cross_modal_block(x, modal_context, prep, num_heads=num_heads, eps=eps)

    # ---- MoE router block ----
    x2d = x.reshape(N, D)
    logits = ln_router(x2d, prep, eps=eps)                      # [N, Ep] f32
    Es, Ei = num_shared_experts, num_image_experts
    shared_masks, shared_loss, shared_usage = topk_route(logits[:, :Es], top_k)
    image_masks, image_loss, _ = topk_route(logits[:, Es:Es + Ei], top_k)
    masks = jnp.concatenate([shared_masks, image_masks], axis=1)  # [N, E_total]

    # ---- MoE experts + final FFN fused (single HBM writeback) ----
    out2d = moe_ffn_block(x2d, masks, prep, eps=eps)
    out = out2d.reshape(B, S, D)

    return {
        "output": out,
        "router_loss": shared_loss + image_loss,
        "attention_weights": attn_w,
        "expert_usage": shared_usage,
    }


# --------------------------------------------------------------------------
# Deterministic parameter init (synthetic; mirrors module __init__ shapes)
# --------------------------------------------------------------------------

def init_params(key, embed_dim, num_shared_experts, num_image_experts):
    D = embed_dim
    hidden = 4 * D
    keys = list(jax.random.split(key, 64))
    kit = iter(keys)

    def tn(shape):  # trunc_normal_(std=0.02)
        return (0.02 * jax.random.truncated_normal(next(kit), -2.0, 2.0, shape)
                ).astype(jnp.float32)

    def zeros(shape):
        return jnp.zeros(shape, jnp.float32)

    def ones(shape):
        return jnp.ones(shape, jnp.float32)

    p = {}
    for name in ("norm1", "norm2", "norm3", "cmn"):
        p[f"{name}_g"] = ones((D,))
        p[f"{name}_b"] = zeros((D,))
    for pre in ("sa", "ca"):  # self-attention / cross-modal attention
        for w in ("wq", "wk", "wv", "wo"):
            p[f"{pre}_{w}"] = tn((D, D))            # stored as [in, out]
        for b in ("bq", "bk", "bv", "bo"):
            p[f"{pre}_{b}"] = zeros((D,))

    def make_expert():
        return {"w1": tn((D, hidden)), "b1": zeros((hidden,)),
                "w2": tn((hidden, D)), "b2": zeros((D,))}

    p["shared_experts"] = [make_expert() for _ in range(num_shared_experts)]
    p["image_experts"] = [make_expert() for _ in range(num_image_experts)]

    p["shared_router_w"] = tn((D, num_shared_experts))
    p["shared_router_b"] = zeros((num_shared_experts,))
    p["image_router_w"] = tn((D, num_image_experts))
    p["image_router_b"] = zeros((num_image_experts,))

    p["ffn_w1"] = tn((D, hidden)); p["ffn_b1"] = zeros((hidden,))
    p["ffn_w2"] = tn((hidden, D)); p["ffn_b2"] = zeros((D,))
    p["gate_w"] = tn((D, D));      p["gate_b"] = zeros((D,))
    return p


# --------------------------------------------------------------------------
if __name__ == "__main__":
    B, S, D, H = 2, 8, 32, 4          # batch, seq, embed_dim, num_heads
    Sm = 4                            # modal_context seq len
    num_shared, num_img, top_k = 2, 2, 1

    key = jax.random.PRNGKey(0)
    kx, kc, kp = jax.random.split(key, 3)
    x = jax.random.normal(kx, (B, S, D), jnp.float32)
    modal_context = jax.random.normal(kc, (B, Sm, D), jnp.float32)
    params = init_params(kp, D, num_shared, num_img)
    prep = prepare_params(params, num_heads=H)     # one-time weight prep

    out = unified_modal_encoder_forward(prep, x, modal_context,
                                        num_heads=H, top_k=top_k,
                                        num_shared_experts=num_shared,
                                        num_image_experts=num_img)
    jax.block_until_ready(out)

    assert out["output"].shape == (B, S, D)
    assert out["attention_weights"].shape == (B, S, S)
    assert out["expert_usage"].shape == (num_shared,)
    assert out["router_loss"].shape == ()
    assert bool(jnp.all(jnp.isfinite(out["output"])))
    assert bool(jnp.all(jnp.isfinite(out["attention_weights"])))
    print("KERNEL_OK")
</pallas_src>

<mosaic_0001>
module attributes {stable_mosaic.version = 11 : i64} {
  func.func @_self_attn_kernel(%arg0: i32, %arg1: memref<1x8x32xf32, #tpu.memory_space<vmem>>, %arg2: memref<1x32xf32, #tpu.memory_space<vmem>>, %arg3: memref<1x32xf32, #tpu.memory_space<vmem>>, %arg4: memref<32x96xbf16, #tpu.memory_space<vmem>>, %arg5: memref<1x96xf32, #tpu.memory_space<vmem>>, %arg6: memref<32x32xbf16, #tpu.memory_space<vmem>>, %arg7: memref<1x32xf32, #tpu.memory_space<vmem>>, %arg8: memref<1x8x32xbf16, #tpu.memory_space<vmem>>, %arg9: memref<1x8x8xf32, #tpu.memory_space<vmem>>) attributes {dimension_semantics = [#tpu.dimension_semantics<parallel>], iteration_bounds = array<i64: 2>, scalar_prefetch = 0 : i64, scratch_operands = 0 : i64, tpu.core_type = #tpu.core_type<tc>, window_params = [{transform_indices = @transform_0, window_bounds = array<i64: 1, 8, 32>}, {pipeline_mode = #tpu.pipeline_mode<synchronous>, transform_indices = @transform_1, window_bounds = array<i64: 1, 32>}, {pipeline_mode = #tpu.pipeline_mode<synchronous>, transform_indices = @transform_2, window_bounds = array<i64: 1, 32>}, {pipeline_mode = #tpu.pipeline_mode<synchronous>, transform_indices = @transform_3, window_bounds = array<i64: 32, 96>}, {pipeline_mode = #tpu.pipeline_mode<synchronous>, transform_indices = @transform_4, window_bounds = array<i64: 1, 96>}, {pipeline_mode = #tpu.pipeline_mode<synchronous>, transform_indices = @transform_5, window_bounds = array<i64: 32, 32>}, {pipeline_mode = #tpu.pipeline_mode<synchronous>, transform_indices = @transform_6, window_bounds = array<i64: 1, 32>}, {transform_indices = @transform_7, window_bounds = array<i64: 1, 8, 32>}, {transform_indices = @transform_8, window_bounds = array<i64: 1, 8, 8>}]} {
    %c0 = arith.constant 0 : index
    %c0_0 = arith.constant 0 : index
    %c0_1 = arith.constant 0 : index
    %0 = vector.load %arg1[%c0, %c0_0, %c0_1] : memref<1x8x32xf32, #tpu.memory_space<vmem>>, vector<1x8x32xf32>
    %1 = vector.shape_cast %0 : vector<1x8x32xf32> to vector<8x32xf32>
    %c0_2 = arith.constant 0 : index
    %c0_3 = arith.constant 0 : index
    %2 = vector.load %arg2[%c0_2, %c0_3] : memref<1x32xf32, #tpu.memory_space<vmem>>, vector<1x32xf32>
    %c0_4 = arith.constant 0 : index
    %c0_5 = arith.constant 0 : index
    %3 = vector.load %arg3[%c0_4, %c0_5] : memref<1x32xf32, #tpu.memory_space<vmem>>, vector<1x32xf32>
    %cst = arith.constant dense<0.000000e+00> : vector<8xf32>
    %4 = vector.multi_reduction <add>, %1, %cst [1] : vector<8x32xf32> to vector<8xf32>
    %5 = vector.shape_cast %4 : vector<8xf32> to vector<8x1xf32>
    %cst_6 = arith.constant 3.200000e+01 : f32
    %6 = vector.broadcast %cst_6 : f32 to vector<8x1xf32>
    %7 = arith.divf %5, %6 : vector<8x1xf32>
    %8 = vector.broadcast %7 : vector<8x1xf32> to vector<8x32xf32>
    %9 = arith.subf %1, %8 : vector<8x32xf32>
    %10 = arith.mulf %9, %9 : vector<8x32xf32>
    %cst_7 = arith.constant dense<0.000000e+00> : vector<8xf32>
    %11 = vector.multi_reduction <add>, %10, %cst_7 [1] : vector<8x32xf32> to vector<8xf32>
    %12 = vector.shape_cast %11 : vector<8xf32> to vector<8x1xf32>
    %cst_8 = arith.constant 3.200000e+01 : f32
    %13 = vector.broadcast %cst_8 : f32 to vector<8x1xf32>
    %14 = arith.divf %12, %13 : vector<8x1xf32>
    %15 = vector.broadcast %7 : vector<8x1xf32> to vector<8x32xf32>
    %16 = arith.subf %1, %15 : vector<8x32xf32>
    %cst_9 = arith.constant 9.99999974E-6 : f32
    %17 = vector.broadcast %cst_9 : f32 to vector<8x1xf32>
    %18 = arith.addf %14, %17 : vector<8x1xf32>
    %19 = math.rsqrt %18 : vector<8x1xf32>
    %20 = vector.broadcast %19 : vector<8x1xf32> to vector<8x32xf32>
    %21 = arith.mulf %16, %20 : vector<8x32xf32>
    %22 = vector.broadcast %2 : vector<1x32xf32> to vector<8x32xf32>
    %23 = arith.mulf %21, %22 : vector<8x32xf32>
    %24 = vector.broadcast %3 : vector<1x32xf32> to vector<8x32xf32>
    %25 = arith.addf %23, %24 : vector<8x32xf32>
    %26 = arith.truncf %25 : vector<8x32xf32> to vector<8x32xbf16>
    %c0_10 = arith.constant 0 : index
    %c0_11 = arith.constant 0 : index
    %27 = vector.load %arg4[%c0_10, %c0_11] : memref<32x96xbf16, #tpu.memory_space<vmem>>, vector<32x96xbf16>
    %cst_12 = arith.constant dense<0.000000e+00> : vector<8x96xf32>
    %28 = tpu.matmul %26, %27, %cst_12 {dimension_numbers = #tpu.dot_dimension_numbers<[1], [0], [0], [1], [0, 0, 1, 1], [], []>} : vector<8x32xbf16>, vector<32x96xbf16>, vector<8x96xf32> -> vector<8x96xf32>
    %c0_13 = arith.constant 0 : index
    %c0_14 = arith.constant 0 : index
    %29 = vector.load %arg5[%c0_13, %c0_14] : memref<1x96xf32, #tpu.memory_space<vmem>>, vector<1x96xf32>
    %30 = vector.broadcast %29 : vector<1x96xf32> to vector<8x96xf32>
    %31 = arith.addf %28, %30 : vector<8x96xf32>
    %32 = vector.extract_strided_slice %31 {offsets = [0, 0], sizes = [8, 32], strides = [1, 1]} : vector<8x96xf32> to vector<8x32xf32>
    %33 = vector.extract_strided_slice %31 {offsets = [0, 32], sizes = [8, 32], strides = [1, 1]} : vector<8x96xf32> to vector<8x32xf32>
    %34 = vector.extract_strided_slice %31 {offsets = [0, 64], sizes = [8, 32], strides = [1, 1]} : vector<8x96xf32> to vector<8x32xf32>
    %35 = vector.shape_cast %32 : vector<8x32xf32> to vector<8x4x8xf32>
    %36 = tpu.transpose %35, [1, 0, 2] : vector<8x4x8xf32> -> vector<4x8x8xf32>
    %37 = arith.truncf %36 : vector<4x8x8xf32> to vector<4x8x8xbf16>
    %38 = vector.shape_cast %33 : vector<8x32xf32> to vector<8x4x8xf32>
    %39 = tpu.transpose %38, [1, 0, 2] : vector<8x4x8xf32> -> vector<4x8x8xf32>
    %40 = arith.truncf %39 : vector<4x8x8xf32> to vector<4x8x8xbf16>
    %41 = vector.shape_cast %34 : vector<8x32xf32> to vector<8x4x8xf32>
    %42 = tpu.transpose %41, [1, 0, 2] : vector<8x4x8xf32> -> vector<4x8x8xf32>
    %43 = arith.truncf %42 : vector<4x8x8xf32> to vector<4x8x8xbf16>
    "tpu.trace_start"() <{level = 10 : i32, message = "hqd,hkd->hqk"}> : () -> ()
    %cst_15 = arith.constant dense<0.000000e+00> : vector<4x8x8xf32>
    %44 = tpu.matmul %37, %40, %cst_15 {dimension_numbers = #tpu.dot_dimension_numbers<[2], [2], [1], [1], [0, 0, 0, 1, 1, 1], [0], [0]>} : vector<4x8x8xbf16>, vector<4x8x8xbf16>, vector<4x8x8xf32> -> vector<4x8x8xf32>
    "tpu.trace_stop"() : () -> ()
    %cst_16 = arith.constant dense<0xFF800000> : vector<4x8xf32>
    %45 = vector.multi_reduction <maximumf>, %44, %cst_16 [2] : vector<4x8x8xf32> to vector<4x8xf32>
    %cst_17 = arith.constant 0xFF800000 : f32
    %46 = vector.broadcast %cst_17 : f32 to vector<4x8xf32>
    %47 = arith.maximumf %46, %45 : vector<4x8xf32>
    %48 = vector.shape_cast %47 : vector<4x8xf32> to vector<4x8x1xf32>
    %49 = vector.broadcast %48 : vector<4x8x1xf32> to vector<4x8x8xf32>
    %50 = arith.subf %44, %49 : vector<4x8x8xf32>
    %51 = math.exp %50 : vector<4x8x8xf32>
    %cst_18 = arith.constant dense<0.000000e+00> : vector<4x8xf32>
    %52 = vector.multi_reduction <add>, %51, %cst_18 [2] : vector<4x8x8xf32> to vector<4x8xf32>
    %53 = vector.shape_cast %52 : vector<4x8xf32> to vector<4x8x1xf32>
    %54 = vector.broadcast %53 : vector<4x8x1xf32> to vector<4x8x8xf32>
    %55 = arith.divf %51, %54 : vector<4x8x8xf32>
    %56 = arith.truncf %55 : vector<4x8x8xf32> to vector<4x8x8xbf16>
    "tpu.trace_start"() <{level = 10 : i32, message = "hqk,hkd->hqd"}> : () -> ()
    %cst_19 = arith.constant dense<0.000000e+00> : vector<4x8x8xf32>
    %57 = tpu.matmul %56, %43, %cst_19 {dimension_numbers = #tpu.dot_dimension_numbers<[2], [1], [1], [2], [0, 0, 0, 1, 1, 2], [0], [0]>} : vector<4x8x8xbf16>, vector<4x8x8xbf16>, vector<4x8x8xf32> -> vector<4x8x8xf32>
    "tpu.trace_stop"() : () -> ()
    %58 = tpu.transpose %57, [1, 0, 2] : vector<4x8x8xf32> -> vector<8x4x8xf32>
    %59 = vector.shape_cast %58 : vector<8x4x8xf32> to vector<8x32xf32>
    %cst_20 = arith.constant dense<0.000000e+00> : vector<8x8xf32>
    %60 = vector.multi_reduction <add>, %55, %cst_20 [0] : vector<4x8x8xf32> to vector<8x8xf32>
    %cst_21 = arith.constant 4.000000e+00 : f32
    %61 = vector.broadcast %cst_21 : f32 to vector<8x8xf32>
    %62 = arith.divf %60, %61 : vector<8x8xf32>
    %63 = arith.truncf %59 : vector<8x32xf32> to vector<8x32xbf16>
    %c0_22 = arith.constant 0 : index
    %c0_23 = arith.constant 0 : index
    %64 = vector.load %arg6[%c0_22, %c0_23] : memref<32x32xbf16, #tpu.memory_space<vmem>>, vector<32x32xbf16>
    %cst_24 = arith.constant dense<0.000000e+00> : vector<8x32xf32>
    %65 = tpu.matmul %63, %64, %cst_24 {dimension_numbers = #tpu.dot_dimension_numbers<[1], [0], [0], [1], [0, 0, 1, 1], [], []>} : vector<8x32xbf16>, vector<32x32xbf16>, vector<8x32xf32> -> vector<8x32xf32>
    %c0_25 = arith.constant 0 : index
    %c0_26 = arith.constant 0 : index
    %66 = vector.load %arg7[%c0_25, %c0_26] : memref<1x32xf32, #tpu.memory_space<vmem>>, vector<1x32xf32>
    %67 = vector.broadcast %66 : vector<1x32xf32> to vector<8x32xf32>
    %68 = arith.addf %65, %67 : vector<8x32xf32>
    %69 = arith.addf %1, %68 : vector<8x32xf32>
    %70 = arith.truncf %69 : vector<8x32xf32> to vector<8x32xbf16>
    %c0_27 = arith.constant 0 : index
    %c0_28 = arith.constant 0 : index
    %c0_29 = arith.constant 0 : index
    %71 = vector.load %arg8[%c0_27, %c0_28, %c0_29] : memref<1x8x32xbf16, #tpu.memory_space<vmem>>, vector<1x8x32xbf16>
    %72 = vector.shape_cast %71 : vector<1x8x32xbf16> to vector<8x32xbf16>
    %73 = vector.shape_cast %70 : vector<8x32xbf16> to vector<1x8x32xbf16>
    tpu.vector_store %arg8[%c0_27, %c0_28, %c0_29], %73 {strides = array<i32>} : memref<1x8x32xbf16, #tpu.memory_space<vmem>>, vector<1x8x32xbf16>,
    %c0_30 = arith.constant 0 : index
    %c0_31 = arith.constant 0 : index
    %c0_32 = arith.constant 0 : index
    %74 = vector.load %arg9[%c0_30, %c0_31, %c0_32] : memref<1x8x8xf32, #tpu.memory_space<vmem>>, vector<1x8x8xf32>
    %75 = vector.shape_cast %74 : vector<1x8x8xf32> to vector<8x8xf32>
    %76 = vector.shape_cast %62 : vector<8x8xf32> to vector<1x8x8xf32>
    tpu.vector_store %arg9[%c0_30, %c0_31, %c0_32], %76 {strides = array<i32>} : memref<1x8x8xf32, #tpu.memory_space<vmem>>, vector<1x8x8xf32>,
    return
  }
  func.func @transform_0(%arg0: i32) -> (i32, i32, i32) {
    %c0_i32 = arith.constant 0 : i32
    %c0_i32_0 = arith.constant 0 : i32
    %c0_i32_1 = arith.constant 0 : i32
    return %arg0, %c0_i32, %c0_i32_0 : i32, i32, i32
  }
  func.func @transform_1(%arg0: i32) -> (i32, i32) {
    %c0_i32 = arith.constant 0 : i32
    %c0_i32_0 = arith.constant 0 : i32
    %c0_i32_1 = arith.constant 0 : i32
    return %c0_i32, %c0_i32_0 : i32, i32
  }
  func.func @transform_2(%arg0: i32) -> (i32, i32) {
    %c0_i32 = arith.constant 0 : i32
    %c0_i32_0 = arith.constant 0 : i32
    %c0_i32_1 = arith.constant 0 : i32
    return %c0_i32, %c0_i32_0 : i32, i32
  }
  func.func @transform_3(%arg0: i32) -> (i32, i32) {
    %c0_i32 = arith.constant 0 : i32
    %c0_i32_0 = arith.constant 0 : i32
    %c0_i32_1 = arith.constant 0 : i32
    return %c0_i32, %c0_i32_0 : i32, i32
  }
  func.func @transform_4(%arg0: i32) -> (i32, i32) {
    %c0_i32 = arith.constant 0 : i32
    %c0_i32_0 = arith.constant 0 : i32
    %c0_i32_1 = arith.constant 0 : i32
    return %c0_i32, %c0_i32_0 : i32, i32
  }
  func.func @transform_5(%arg0: i32) -> (i32, i32) {
    %c0_i32 = arith.constant 0 : i32
    %c0_i32_0 = arith.constant 0 : i32
    %c0_i32_1 = arith.constant 0 : i32
    return %c0_i32, %c0_i32_0 : i32, i32
  }
  func.func @transform_6(%arg0: i32) -> (i32, i32) {
    %c0_i32 = arith.constant 0 : i32
    %c0_i32_0 = arith.constant 0 : i32
    %c0_i32_1 = arith.constant 0 : i32
    return %c0_i32, %c0_i32_0 : i32, i32
  }
  func.func @transform_7(%arg0: i32) -> (i32, i32, i32) {
    %c0_i32 = arith.constant 0 : i32
    %c0_i32_0 = arith.constant 0 : i32
    %c0_i32_1 = arith.constant 0 : i32
    return %arg0, %c0_i32, %c0_i32_0 : i32, i32, i32
  }
  func.func @transform_8(%arg0: i32) -> (i32, i32, i32) {
    %c0_i32 = arith.constant 0 : i32
    %c0_i32_0 = arith.constant 0 : i32
    %c0_i32_1 = arith.constant 0 : i32
    return %arg0, %c0_i32, %c0_i32_0 : i32, i32, i32
  }
}

</mosaic_0001>

<llo_original>
// kernel: tpu_custom_call.1
$region0: #{tpu_custom_call.1}
  #allocation0 [shape = 'u32[]', space=smem, size = 0x4, offset = 0x4, fixed_abs, tag = 'smem constant byte address 0x4 - core index']
  #allocation1 [shape = 'u32[72,128]{1,0:T(1,128)}', space=vmem, size = 0x9000, scoped, tag = 'internal scratch']
  %s0 = inlined_call_operand.hbm [shape: f32[2,8,32], index: 0, kind: input, shape index: {}]
  %s1 = inlined_call_operand.hbm [shape: f32[1,32], index: 1, kind: input, shape index: {}]
  %s2 = inlined_call_operand.vmem [shape: f32[1,32], index: 2, kind: input, shape index: {}]
  %s3 = inlined_call_operand.hbm [shape: bf16[32,96], index: 3, kind: input, shape index: {}]
  %s4 = inlined_call_operand.vmem [shape: f32[1,96], index: 4, kind: input, shape index: {}]
  %s5 = inlined_call_operand.hbm [shape: bf16[32,32], index: 5, kind: input, shape index: {}]
  %s6 = inlined_call_operand.vmem [shape: f32[1,32], index: 6, kind: input, shape index: {}]
  %s7 = inlined_call_operand.hbm [shape: bf16[2,8,32], index: 7, kind: output, shape index: {0}]
  %s8 = inlined_call_operand.hbm [shape: f32[2,8,8], index: 8, kind: output, shape index: {1}]
  %9 = xla_tuple %s7, %s8
  %s10 = sld [smem:[#allocation0]]
  $region85: #{tpu_custom_call.1} parent=0
    _
  %s12 = ssub.s32 1, %s10
  %s13 = scalar_select 0, %s12, %s10
  $region1: #{tpu_custom_call.1} parent=0
    #allocation2 [shape = 'u8[8192]{0}', space=vmem, size = 0x2000, scoped, tag = 'input window, operand 0']
    #allocation3 [shape = 's32[2]{0}', space=sflag, size = 0x8, scoped, tag = 'scoped memory for tpu_custom_call.1']
    #allocation4 [shape = 's32[2]{0}', space=sflag, size = 0x8, scoped, tag = 'scoped memory for tpu_custom_call.1']
    #allocation5 [shape = 'u8[512]{0}', space=vmem, size = 0x400, scoped, tag = 'input window, operand 1, single buffered']
    #allocation6 [shape = 's32[1]{0}', space=sflag, size = 0x4, scoped, tag = 'scoped memory for tpu_custom_call.1']
    #allocation7 [shape = 'u8[8192]{0}', space=vmem, size = 0x2000, scoped, tag = 'input window, operand 3, single buffered']
    #allocation8 [shape = 'u8[8192]{0}', space=vmem, size = 0x2000, scoped, tag = 'input window, operand 5, single buffered']
    #allocation9 [shape = 's32[1]{0}', space=sflag, size = 0x4, scoped, tag = 'scoped memory for tpu_custom_call.1']
    #allocation10 [shape = 'u8[4096]{0}', space=vmem, size = 0x1000, scoped, tag = 'output window, operand 0']
    #allocation11 [shape = 'u8[8192]{0}', space=vmem, size = 0x2000, scoped, tag = 'output window, operand 1']
    #allocation12 [shape = 's32[2]{0}', space=sflag, size = 0x8, scoped, tag = 'scoped memory for tpu_custom_call.1']
    %14 = vsyncpa [#allocation3], 0
    %s15 = scalar_lea.sflag [#allocation3], 1
    %16 = vsyncpa %s15, 0
    %17 = vsyncpa [#allocation6], 0
    %18 = vsyncpa [#allocation9], 0
    %19 = vsyncpa [#allocation4], 0
    %s20 = scalar_lea.sflag [#allocation4], 1
    %21 = vsyncpa %s20, 0
    %22 = vsyncpa [#allocation12], 0
    %s23 = scalar_lea.sflag [#allocation12], 1
    %24 = vsyncpa %s23, 0
    loop: start=0, step=1, limit=4
    $region2: #{tpu_custom_call.1} parent=1 // loop_pre_header
      _
    $region3: #{tpu_custom_call.1} parent=1 // loop_header
      %s26 = sphi 0, %s30
      %p27 = scmp.ge.s32.totalorder %s26, 4
      %s36 = sphi 0, %s38
      %s39 = sphi 0, %s36
      %s40 = sphi 0, %s39
      %s56 = sphi 0, %s40
      %s60 = sphi 0, %s60
      %s62 = sphi 0, %s60
      %s63 = sphi 0, %s62
      %s77 = sphi 0, %s63
      %s81 = sphi 0, %s81
      %s83 = sphi 0, %s81
      %s84 = sphi 0, %s83
      %s98 = sphi 0, %s84
      %s102 = sphi 0, %s102
      %s104 = sphi 0, %s102
      %s105 = sphi 0, %s104
      %s119 = sphi 0, %s105
      %s123 = sphi 0, %s123
      %s125 = sphi 0, %s123
      %s126 = sphi 0, %s125
      %s140 = sphi 0, %s126
      %s144 = sphi 0, %s144
      %s146 = sphi 0, %s144
      %s147 = sphi 0, %s146
      %s161 = sphi 0, %s147
      %s165 = sphi 0, %s165
      %s167 = sphi 0, %s165
      %s168 = sphi 0, %s167
      %s182 = sphi 0, %s168
      %s188 = sphi 0, %s190
      %s191 = sphi 0, %s188
      %s192 = sphi 0, %s191
      %s208 = sphi 0, %s192
      %s214 = sphi 0, %s216
      %s217 = sphi 0, %s214
      %s218 = sphi 0, %s217
      %s234 = sphi 0, %s218
    $region4: #{tpu_custom_call.1} parent=1 // loop_header_branch
      %29 = sbr.rel (%p27) target = $region8
    $region5: #{tpu_custom_call.1} parent=1 // loop_body
      %s31 = ssub.s32 %s26, 1
      %s32 = ssub.s32 %s26, 2
      %s33 = sadd.s32 %s26, 1
      %s34 = ssub.s32 %s26, %s33
      %p35 = scmp.eq.s32.totalorder %s34, 0
      %s37 = sadd.s32 %s36, 1
      %s38 = scalar_select %p35, %s36, %s37
      %p41 = pneg %p35
      %p42 = scmp.eq.s32.totalorder %s26, 1
      %p43 = por %p41, %p42
      %p44 = scmp.ne.s32.totalorder %s36, %s39
      %p45 = scmp.eq.s32.totalorder %s26, 0
      %p46 = por %p44, %p45
      %p47 = scmp.ne.s32.totalorder %s36, %s39
      %p48 = scmp.eq.s32.totalorder %s31, 1
      %p49 = por %p47, %p48
      %p50 = scmp.ne.s32.totalorder %s39, %s40
      %p51 = scmp.eq.s32.totalorder %s31, 0
      %p52 = por %p50, %p51
      %p53 = scmp.ne.s32.totalorder %s39, %s40
      %p54 = scmp.eq.s32.totalorder %s32, 1
      %p55 = por %p53, %p54
      %p57 = scmp.ne.s32.totalorder %s40, %s56
      %p58 = scmp.eq.s32.totalorder %s32, 0
      %p59 = por %p57, %p58
      %s61 = sadd.s32 %s60, 1
      %p64 = scmp.eq.s32.totalorder %s26, 1
      %p65 = scmp.ne.s32.totalorder %s60, %s62
      %p66 = scmp.eq.s32.totalorder %s26, 0
      %p67 = por %p65, %p66
      %p68 = scmp.ne.s32.totalorder %s60, %s62
      %p69 = scmp.eq.s32.totalorder %s31, 1
      %p70 = por %p68, %p69
      %p71 = scmp.ne.s32.totalorder %s62, %s63
      %p72 = scmp.eq.s32.totalorder %s31, 0
      %p73 = por %p71, %p72
      %p74 = scmp.ne.s32.totalorder %s62, %s63
      %p75 = scmp.eq.s32.totalorder %s32, 1
      %p76 = por %p74, %p75
      %p78 = scmp.ne.s32.totalorder %s63, %s77
      %p79 = scmp.eq.s32.totalorder %s32, 0
      %p80 = por %p78, %p79
      %s82 = sadd.s32 %s81, 1
      %p85 = scmp.eq.s32.totalorder %s26, 1
      %p86 = scmp.ne.s32.totalorder %s81, %s83
      %p87 = scmp.eq.s32.totalorder %s26, 0
      %p88 = por %p86, %p87
      %p89 = scmp.ne.s32.totalorder %s81, %s83
      %p90 = scmp.eq.s32.totalorder %s31, 1
      %p91 = por %p89, %p90
      %p92 = scmp.ne.s32.totalorder %s83, %s84
      %p93 = scmp.eq.s32.totalorder %s31, 0
      %p94 = por %p92, %p93
      %p95 = scmp.ne.s32.totalorder %s83, %s84
      %p96 = scmp.eq.s32.totalorder %s32, 1
      %p97 = por %p95, %p96
      %p99 = scmp.ne.s32.totalorder %s84, %s98
      %p100 = scmp.eq.s32.totalorder %s32, 0
      %p101 = por %p99, %p100
      %s103 = sadd.s32 %s102, 1
      %p106 = scmp.eq.s32.totalorder %s26, 1
      %p107 = scmp.ne.s32.totalorder %s102, %s104
      %p108 = scmp.eq.s32.totalorder %s26, 0
      %p109 = por %p107, %p108
      %p110 = scmp.ne.s32.totalorder %s102, %s104
      %p111 = scmp.eq.s32.totalorder %s31, 1
      %p112 = por %p110, %p111
      %p113 = scmp.ne.s32.totalorder %s104, %s105
      %p114 = scmp.eq.s32.totalorder %s31, 0
      %p115 = por %p113, %p114
      %p116 = scmp.ne.s32.totalorder %s104, %s105
      %p117 = scmp.eq.s32.totalorder %s32, 1
      %p118 = por %p116, %p117
      %p120 = scmp.ne.s32.totalorder %s105, %s119
      %p121 = scmp.eq.s32.totalorder %s32, 0
      %p122 = por %p120, %p121
      %s124 = sadd.s32 %s123, 1
      %p127 = scmp.eq.s32.totalorder %s26, 1
      %p128 = scmp.ne.s32.totalorder %s123, %s125
      %p129 = scmp.eq.s32.totalorder %s26, 0
      %p130 = por %p128, %p129
      %p131 = scmp.ne.s32.totalorder %s123, %s125
      %p132 = scmp.eq.s32.totalorder %s31, 1
      %p133 = por %p131, %p132
      %p134 = scmp.ne.s32.totalorder %s125, %s126
      %p135 = scmp.eq.s32.totalorder %s31, 0
      %p136 = por %p134, %p135
      %p137 = scmp.ne.s32.totalorder %s125, %s126
      %p138 = scmp.eq.s32.totalorder %s32, 1
      %p139 = por %p137, %p138
      %p141 = scmp.ne.s32.totalorder %s126, %s140
      %p142 = scmp.eq.s32.totalorder %s32, 0
      %p143 = por %p141, %p142
      %s145 = sadd.s32 %s144, 1
      %p148 = scmp.eq.s32.totalorder %s26, 1
      %p149 = scmp.ne.s32.totalorder %s144, %s146
      %p150 = scmp.eq.s32.totalorder %s26, 0
      %p151 = por %p149, %p150
      %p152 = scmp.ne.s32.totalorder %s144, %s146
      %p153 = scmp.eq.s32.totalorder %s31, 1
      %p154 = por %p152, %p153
      %p155 = scmp.ne.s32.totalorder %s146, %s147
      %p156 = scmp.eq.s32.totalorder %s31, 0
      %p157 = por %p155, %p156
      %p158 = scmp.ne.s32.totalorder %s146, %s147
      %p159 = scmp.eq.s32.totalorder %s32, 1
      %p160 = por %p158, %p159
      %p162 = scmp.ne.s32.totalorder %s147, %s161
      %p163 = scmp.eq.s32.totalorder %s32, 0
      %p164 = por %p162, %p163
      %s166 = sadd.s32 %s165, 1
      %p169 = scmp.eq.s32.totalorder %s26, 1
      %p170 = scmp.ne.s32.totalorder %s165, %s167
      %p171 = scmp.eq.s32.totalorder %s26, 0
      %p172 = por %p170, %p171
      %p173 = scmp.ne.s32.totalorder %s165, %s167
      %p174 = scmp.eq.s32.totalorder %s31, 1
      %p175 = por %p173, %p174
      %p176 = scmp.ne.s32.totalorder %s167, %s168
      %p177 = scmp.eq.s32.totalorder %s31, 0
      %p178 = por %p176, %p177
      %p179 = scmp.ne.s32.totalorder %s167, %s168
      %p180 = scmp.eq.s32.totalorder %s32, 1
      %p181 = por %p179, %p180
      %p183 = scmp.ne.s32.totalorder %s168, %s182
      %p184 = scmp.eq.s32.totalorder %s32, 0
      %p185 = por %p183, %p184
      %s186 = ssub.s32 %s26, %s33
      %p187 = scmp.eq.s32.totalorder %s186, 0
      %s189 = sadd.s32 %s188, 1
      %s190 = scalar_select %p187, %s188, %s189
      %p193 = pneg %p187
      %p194 = scmp.eq.s32.totalorder %s26, 1
      %p195 = por %p193, %p194
      %p196 = scmp.ne.s32.totalorder %s188, %s191
      %p197 = scmp.eq.s32.totalorder %s26, 0
      %p198 = por %p196, %p197
      %p199 = scmp.ne.s32.totalorder %s188, %s191
      %p200 = scmp.eq.s32.totalorder %s31, 1
      %p201 = por %p199, %p200
      %p202 = scmp.ne.s32.totalorder %s191, %s192
      %p203 = scmp.eq.s32.totalorder %s31, 0
      %p204 = por %p202, %p203
      %p205 = scmp.ne.s32.totalorder %s191, %s192
      %p206 = scmp.eq.s32.totalorder %s32, 1
      %p207 = por %p205, %p206
      %p209 = scmp.ne.s32.totalorder %s192, %s208
      %p210 = scmp.eq.s32.totalorder %s32, 0
      %p211 = por %p209, %p210
      %s212 = ssub.s32 %s26, %s33
      %p213 = scmp.eq.s32.totalorder %s212, 0
      %s215 = sadd.s32 %s214, 1
      %s216 = scalar_select %p213, %s214, %s215
      %p219 = pneg %p213
      %p220 = scmp.eq.s32.totalorder %s26, 1
      %p221 = por %p219, %p220
      %p222 = scmp.ne.s32.totalorder %s214, %s217
      %p223 = scmp.eq.s32.totalorder %s26, 0
      %p224 = por %p222, %p223
      %p225 = scmp.ne.s32.totalorder %s214, %s217
      %p226 = scmp.eq.s32.totalorder %s31, 1
      %p227 = por %p225, %p226
      %p228 = scmp.ne.s32.totalorder %s217, %s218
      %p229 = scmp.eq.s32.totalorder %s31, 0
      %p230 = por %p228, %p229
      %p231 = scmp.ne.s32.totalorder %s217, %s218
      %p232 = scmp.eq.s32.totalorder %s32, 1
      %p233 = por %p231, %p232
      %p235 = scmp.ne.s32.totalorder %s218, %s234
      %p236 = scmp.eq.s32.totalorder %s32, 0
      %p237 = por %p235, %p236
      %p238 = scmp.le.s32.totalorder 1, %s26
      %p239 = scmp.lt.s32.totalorder %s26, 3
      %p240 = pnand %p238, %p239
      %p241 = pneg %p240
      // Predicated region
      $region9: #{tpu_custom_call.1} parent=5 // pred_check
        _
      $region10: #{tpu_custom_call.1} parent=5 // pred_check_branch
        %243 = sbr.rel (%p240) target = $region12
      $region11: #{tpu_custom_call.1} parent=5 // pred_region
        %s244 = ssub.s32 %s26, 1
        // Predicated region
        $region13: #{tpu_custom_call.1} parent=11 // pred_check
          %p245 = pneg %p73
        $region14: #{tpu_custom_call.1} parent=11 // pred_check_branch
          %247 = sbr.rel (%p245) target = $region16
        $region15: #{tpu_custom_call.1} parent=11 // pred_region
          %249 = vsyncadd [#allocation6], 0
          %s251 = sshll.u32 %s1, 4
          %s252 = int_to_ptr.hbm [resolvable:$true] %s251
          %s253 = sshll.u32 [#allocation5], 4
          %s254 = int_to_ptr.vmem [resolvable:$true] %s253
          %256 = dma.hbm_to_vmem [thread:$0]  %s252, 16, %s254, [#allocation6]
        $region16: #{tpu_custom_call.1} parent=11 // pred_fallthru
          _
        // Predicated region
        $region17: #{tpu_custom_call.1} parent=11 // pred_check
          %p257 = pneg %p94
        $region18: #{tpu_custom_call.1} parent=11 // pred_check_branch
          %259 = sbr.rel (%p257) target = $region20
        $region19: #{tpu_custom_call.1} parent=11 // pred_region
          _
        $region20: #{tpu_custom_call.1} parent=11 // pred_fallthru
          _
        // Predicated region
        $region21: #{tpu_custom_call.1} parent=11 // pred_check
          %p260 = pneg %p115
        $region22: #{tpu_custom_call.1} parent=11 // pred_check_branch
          %262 = sbr.rel (%p260) target = $region24
        $region23: #{tpu_custom_call.1} parent=11 // pred_region
          %264 = vsyncadd [#allocation6], 0
          %s265 = sshll.u32 %s3, 4
          %s266 = int_to_ptr.hbm [resolvable:$true] %s265
          %s267 = sshll.u32 [#allocation7], 4
          %s268 = int_to_ptr.vmem [resolvable:$true] %s267
          %273 = dma.hbm_to_vmem [thread:$0]  %s266, 256, %s268, [#allocation6], 64, 64, 4
        $region24: #{tpu_custom_call.1} parent=11 // pred_fallthru
          _
        // Predicated region
        $region25: #{tpu_custom_call.1} parent=11 // pred_check
          %p274 = pneg %p136
        $region26: #{tpu_custom_call.1} parent=11 // pred_check_branch
          %276 = sbr.rel (%p274) target = $region28
        $region27: #{tpu_custom_call.1} parent=11 // pred_region
          _
        $region28: #{tpu_custom_call.1} parent=11 // pred_fallthru
          _
        // Predicated region
        $region29: #{tpu_custom_call.1} parent=11 // pred_check
          %p277 = pneg %p157
        $region30: #{tpu_custom_call.1} parent=11 // pred_check_branch
          %279 = sbr.rel (%p277) target = $region32
        $region31: #{tpu_custom_call.1} parent=11 // pred_region
          %281 = vsyncadd [#allocation9], 0
          %s282 = sshll.u32 %s5, 4
          %s283 = int_to_ptr.hbm [resolvable:$true] %s282
          %s284 = sshll.u32 [#allocation8], 4
          %s285 = int_to_ptr.vmem [resolvable:$true] %s284
          %290 = dma.hbm_to_vmem [thread:$0]  %s283, 256, %s285, [#allocation9], 64, 64, 4
        $region32: #{tpu_custom_call.1} parent=11 // pred_fallthru
          _
        // Predicated region
        $region33: #{tpu_custom_call.1} parent=11 // pred_check
          %p291 = pneg %p178
        $region34: #{tpu_custom_call.1} parent=11 // pred_check_branch
          %293 = sbr.rel (%p291) target = $region36
        $region35: #{tpu_custom_call.1} parent=11 // pred_region
          _
        $region36: #{tpu_custom_call.1} parent=11 // pred_fallthru
          _
      $region12: #{tpu_custom_call.1} parent=5 // pred_fallthru
        _
      %p294 = scmp.lt.s32.totalorder %s26, 2
      // Predicated region
      $region37: #{tpu_custom_call.1} parent=5 // pred_check
        %p295 = pneg %p294
      $region38: #{tpu_custom_call.1} parent=5 // pred_check_branch
        %297 = sbr.rel (%p295) target = $region40
      $region39: #{tpu_custom_call.1} parent=5 // pred_region
        // Predicated region
        $region41: #{tpu_custom_call.1} parent=39 // pred_check
          %p298 = pneg %p46
        $region42: #{tpu_custom_call.1} parent=39 // pred_check_branch
          %300 = sbr.rel (%p298) target = $region44
        $region43: #{tpu_custom_call.1} parent=39 // pred_region
          %s301 = sand.u32 %s36, 1
          %s302 = scalar_lea.sflag [#allocation3], %s301
          %s303 = sand.u32 %s36, 1
          %s304 = smul.addr %s303, 8
          %s305 = scalar_lea.vmem [#allocation2], %s304
          %307 = vsyncadd %s302, 0
          %s308 = smul.addr %s26, 8
          %s309 = scalar_lea.hbm %s0, %s308
          %s311 = sshll.u32 %s309, 4
          %s312 = int_to_ptr.hbm [resolvable:$true] %s311
          %s313 = sshll.u32 %s305, 4
          %s314 = int_to_ptr.vmem [resolvable:$true] %s313
          %316 = dma.hbm_to_vmem [thread:$0]  %s312, 128, %s314, %s302
        $region44: #{tpu_custom_call.1} parent=39 // pred_fallthru
          _
      $region40: #{tpu_custom_call.1} parent=5 // pred_fallthru
        _
      %p317 = scmp.le.s32.totalorder 1, %s26
      %p318 = scmp.lt.s32.totalorder %s26, 3
      %p319 = pnand %p317, %p318
      %p320 = pneg %p319
      // Predicated region
      $region45: #{tpu_custom_call.1} parent=5 // pred_check
        _
      $region46: #{tpu_custom_call.1} parent=5 // pred_check_branch
        %322 = sbr.rel (%p319) target = $region48
      $region47: #{tpu_custom_call.1} parent=5 // pred_region
        %s323 = ssub.s32 %s26, 1
        %s324 = sand.u32 %s39, 1
        %s325 = scalar_lea.sflag [#allocation3], %s324
        %s326 = sand.u32 %s39, 1
        %s327 = smul.addr %s326, 8
        %s328 = scalar_lea.vmem [#allocation2], %s327
        // Predicated region
        $region49: #{tpu_custom_call.1} parent=47 // pred_check
          %p329 = pneg %p52
        $region50: #{tpu_custom_call.1} parent=47 // pred_check_branch
          %331 = sbr.rel (%p329) target = $region52
        $region51: #{tpu_custom_call.1} parent=47 // pred_region
          %333 = dma.done %s325, 128
        $region52: #{tpu_custom_call.1} parent=47 // pred_fallthru
          _
        // Predicated region
        $region53: #{tpu_custom_call.1} parent=47 // pred_check
          %p334 = pneg %p73
        $region54: #{tpu_custom_call.1} parent=47 // pred_check_branch
          %336 = sbr.rel (%p334) target = $region56
        $region55: #{tpu_custom_call.1} parent=47 // pred_region
          %338 = dma.done [#allocation6], 16
        $region56: #{tpu_custom_call.1} parent=47 // pred_fallthru
          _
        // Predicated region
        $region57: #{tpu_custom_call.1} parent=47 // pred_check
          %p339 = pneg %p115
        $region58: #{tpu_custom_call.1} parent=47 // pred_check_branch
          %341 = sbr.rel (%p339) target = $region60
        $region59: #{tpu_custom_call.1} parent=47 // pred_region
          %343 = dma.done [#allocation6], 256
        $region60: #{tpu_custom_call.1} parent=47 // pred_fallthru
          _
        // Predicated region
        $region61: #{tpu_custom_call.1} parent=47 // pred_check
          %p344 = pneg %p157
        $region62: #{tpu_custom_call.1} parent=47 // pred_check_branch
          %346 = sbr.rel (%p344) target = $region64
        $region63: #{tpu_custom_call.1} parent=47 // pred_region
          %348 = dma.done [#allocation9], 256
        $region64: #{tpu_custom_call.1} parent=47 // pred_fallthru
          _
        %s349 = sand.u32 %s39, 1
        %s350 = scalar_lea.sflag [#allocation3], %s349
        %s351 = sand.u32 %s39, 1
        %s352 = smul.addr %s351, 8
        %s353 = scalar_lea.vmem [#allocation2], %s352
        %p354 = pneg %p52
        %p355 = pneg %p49
        %p356 = pneg %p73
        %p357 = pneg %p70
        %p358 = pneg %p94
        %p359 = pneg %p91
        %p360 = pneg %p115
        %p361 = pneg %p112
        %p362 = pneg %p136
        %p363 = pneg %p133
        %p364 = pneg %p157
        %p365 = pneg %p154
        %p366 = pneg %p178
        %p367 = pneg %p175
        %p368 = pneg %p204
        %p369 = pneg %p201
        %s370 = sand.u32 %s191, 1
        %s371 = scalar_lea.sflag [#allocation4], %s370
        %s372 = sand.u32 %s191, 1
        %s373 = smul.addr %s372, 4
        %s374 = scalar_lea.vmem [#allocation10], %s373
        %p375 = pneg %p230
        %p376 = pneg %p227
        %s377 = sand.u32 %s217, 1
        %s378 = scalar_lea.sflag [#allocation12], %s377
        %s379 = sand.u32 %s217, 1
        %s380 = smul.addr %s379, 8
        %s381 = scalar_lea.vmem [#allocation11], %s380
        %v383 = vld [vmem:[%s328] sm:$0xff]
        %v384 = vld [vmem:[#allocation5] sm:$0x1]
        %v385 = vld [vmem:[%s2] sm:$0x1]
        %vm386 = vcmask 261120
        %v387 = vsel %vm386, %v383, 0.0
        %388 = vadd.xlane.f32.xlu0 %v387
        %v389 = vpop.xlane.xlu0 %388
        %v390 = vrcp.pop 32.0
        %v391 = vmul.f32 32.0, %v390
        %v392 = vsub.f32 1.0, %v391
        %v393 = vmul.f32 %v390, %v392
        %v394 = vadd.f32 %v390, %v393
        %vm395 = vweird.f32 %v390
        %v396 = vsel %vm395, %v390, %v394
        %v397 = vmul.f32 %v389, %v396
        %v398 = vsub.f32 %v383, %v397
        %v399 = vmul.f32 %v398, %v398
        %v400 = vsel %vm386, %v399, 0.0
        %401 = vadd.xlane.f32.xlu0 %v400
        %v402 = vpop.xlane.xlu0 %401
        %v403 = vmul.f32 %v402, %v396
        %v404 = vadd.f32 %v403, 1e-05
        %v405 = vrsqrt.pop %v404
        %v406 = vmul.f32 %v405, %v404
        %v407 = vmul.f32 %v406, %v405
        %v408 = vmul.f32 0.5, %v407
        %v409 = vsub.f32 1.5, %v408
        %v410 = vmul.f32 %v405, %v409
        %vm411 = vweird.f32 %v404
        %vm412 = vweird.f32 %v405
        %vm413 = vmor %vm411, %vm412
        %v414 = vsel %vm413, %v405, %v410
        %v415 = vmul.f32 %v398, %v414
        %v417 = vperm.slane %v384, 0
        %v419 = vmul.f32 %v415, %v417
        %v421 = vperm.slane %v385, 0
        %v423 = vadd.f32 %v419, %v421
        %v424 = vpack.c.bf16 %v423, %v423
        %v425 = vld [vmem:[#allocation7] sm:$0xf]
        %v426 = vld [vmem:[#allocation7 + $0x4] sm:$0xf]
        %v427 = vld [vmem:[#allocation7 + $0x8] sm:$0xf]
        %v428 = vld [vmem:[#allocation7 + $0xc] sm:$0xf]
        %v429 = vld [vmem:[%s4] sm:$0x1]
        %v431 = vperm.slane %v429, 0
        %v437 = vunpack.c.l.b16 %v425
        %v438 = vunpack.c.l.b16 %v426
        %v439 = vunpack.c.l.b16 %v427
        %v440 = vunpack.c.l.b16 %v428
        %v441 = vpack.c.b16 %v438, %v437
        %v442 = vpack.c.b16 %v440, %v439
        %v446 = vsel %vm386, %v424, 0
        %448 = vmatpush.bf16.msra.mxu0 0
        %449 = vmatpush.bf16.msra.mxu0 0
        %450 = vmatpush.bf16.msra.mxu0 0
        %451 = vmatpush.bf16.msra.mxu0 0
        %452 = vmatpush.bf16.msra.mxu0 0
        %453 = vmatpush.bf16.msra.mxu0 0
        %454 = vmatpush.bf16.msra.mxu0 %v442
        %455 = vmatpush.bf16.msra.mxu0 %v441
        %456 = vmatmul.bf16.gmra.mxu0 %v446
        %v457 = vpop.f32.mrf.mxu0
        %v458 = vadd.f32 %v431, %v457
        %v459 = vpop.f32.mrf.mxu0
        %460 = vdwg.mxu0
        %462 = vrot.lane.b32.xlu0 %v458, 120
        %v463 = vpop.permute.xlu0 %462
        %465 = vrot.lane.b32.xlu0 %v458, 112
        %v466 = vpop.permute.xlu0 %465
        %468 = vrot.lane.b32.xlu0 %v458, 104
        %v469 = vpop.permute.xlu0 %468
        %v471 = vrot.slane %v466, 4
        %vm472 = vcmask 1047556
        %v473 = vsel %vm472, %v471, %v458
        %v474 = vrot.slane %v458, 4
        %v475 = vsel %vm472, %v466, %v474
        %v477 = vunpack.c.l.s4 1983009808
        %v478 = vunpack.c.0.s8 %v477
        %v479 = vperm.slane %v473, %v478
        %v481 = vunpack.c.l.s4 1983009808
        %v482 = vunpack.c.0.s8 %v481
        %v483 = vperm.slane %v475, %v482
        %v484 = vrot.slane %v469, 4
        %v485 = vsel %vm472, %v484, %v463
        %v486 = vrot.slane %v463, 4
        %v487 = vsel %vm472, %v469, %v486
        %v489 = vunpack.c.l.s4 1983009808
        %v490 = vunpack.c.0.s8 %v489
        %v491 = vperm.slane %v485, %v490
        %v493 = vunpack.c.l.s4 1983009808
        %v494 = vunpack.c.0.s8 %v493
        %v495 = vperm.slane %v487, %v494
        %v496 = vrot.slane %v491, 4
        %v497 = vsel %vm472, %v496, %v479
        %v498 = vrot.slane %v479, 4
        %v499 = vsel %vm472, %v491, %v498
        %v501 = vunpack.c.l.s4 1934713408
        %v502 = vunpack.c.0.s8 %v501
        %v503 = vperm.slane %v497, %v502
        %v505 = vunpack.c.l.s4 1934713408
        %v506 = vunpack.c.0.s8 %v505
        %v507 = vperm.slane %v499, %v506
        %v508 = vrot.slane %v495, 4
        %v509 = vsel %vm472, %v508, %v483
        %v510 = vrot.slane %v483, 4
        %v511 = vsel %vm472, %v495, %v510
        %v513 = vunpack.c.l.s4 1934713408
        %v514 = vunpack.c.0.s8 %v513
        %v515 = vperm.slane %v509, %v514
        %v517 = vunpack.c.l.s4 1934713408
        %v518 = vunpack.c.0.s8 %v517
        %v519 = vperm.slane %v511, %v518
        %v520 = vrot.slane %v503, 4
        %v521 = vsel %vm472, 0.0, %v520
        %v522 = vrot.slane %v507, 4
        %v523 = vsel %vm472, 0.0, %v522
        %v524 = vrot.slane %v515, 4
        %v525 = vsel %vm472, 0.0, %v524
        %v526 = vrot.slane %v519, 4
        %v527 = vsel %vm472, 0.0, %v526
        %v528 = vsel %vm472, %v522, %v503
        %v530 = vunpack.c.l.s4 1983009808
        %v531 = vunpack.c.0.s8 %v530
        %v532 = vperm.slane %v528, %v531
        %v533 = vrot.slane %v523, 4
        %v534 = vsel %vm472, %v533, %v521
        %v536 = vunpack.c.l.s4 1983009808
        %v537 = vunpack.c.0.s8 %v536
        %v538 = vperm.slane %v534, %v537
        %v539 = vsel %vm472, %v526, %v515
        %v541 = vunpack.c.l.s4 1983009808
        %v542 = vunpack.c.0.s8 %v541
        %v543 = vperm.slane %v539, %v542
        %v544 = vrot.slane %v527, 4
        %v545 = vsel %vm472, %v544, %v525
        %v547 = vunpack.c.l.s4 1983009808
        %v548 = vunpack.c.0.s8 %v547
        %v549 = vperm.slane %v545, %v548
        %v550 = vrot.slane %v538, 4
        %v551 = vsel %vm472, %v550, %v532
        %v552 = vrot.slane %v532, 4
        %v553 = vsel %vm472, %v538, %v552
        %v555 = vunpack.c.l.s4 1934713408
        %v556 = vunpack.c.0.s8 %v555
        %v557 = vperm.slane %v551, %v556
        %v559 = vunpack.c.l.s4 1934713408
        %v560 = vunpack.c.0.s8 %v559
        %v561 = vperm.slane %v553, %v560
        %v562 = vrot.slane %v549, 4
        %v563 = vsel %vm472, %v562, %v543
        %v564 = vrot.slane %v543, 4
        %v565 = vsel %vm472, %v549, %v564
        %v567 = vunpack.c.l.s4 1934713408
        %v568 = vunpack.c.0.s8 %v567
        %v569 = vperm.slane %v563, %v568
        %v571 = vunpack.c.l.s4 1934713408
        %v572 = vunpack.c.0.s8 %v571
        %v573 = vperm.slane %v565, %v572
        %v574 = vrot.slane %v569, 4
        %v575 = vsel %vm472, %v574, %v557
        %v576 = vrot.slane %v557, 4
        %v577 = vsel %vm472, %v569, %v576
        %v578 = vrot.slane %v573, 4
        %v579 = vsel %vm472, %v578, %v561
        %v580 = vrot.slane %v561, 4
        %v581 = vsel %vm472, %v573, %v580
        %v582 = vpack.c.bf16 %v575, %v575
        %v583 = vpack.c.bf16 %v577, %v577
        %v584 = vpack.c.bf16 %v579, %v579
        %v585 = vpack.c.bf16 %v581, %v581
        %586 = vrot.lane.b32.xlu0 %v458, 96
        %v587 = vpop.permute.xlu0 %586
        %588 = vrot.lane.b32.xlu0 %v463, 96
        %v589 = vpop.permute.xlu0 %588
        %590 = vrot.lane.b32.xlu0 %v466, 96
        %v591 = vpop.permute.xlu0 %590
        %592 = vrot.lane.b32.xlu0 %v469, 96
        %v593 = vpop.permute.xlu0 %592
        %v598 = vrot.slane %v591, 4
        %v599 = vsel %vm472, %v598, %v587
        %v600 = vrot.slane %v587, 4
        %v601 = vsel %vm472, %v591, %v600
        %v603 = vunpack.c.l.s4 1983009808
        %v604 = vunpack.c.0.s8 %v603
        %v605 = vperm.slane %v599, %v604
        %v607 = vunpack.c.l.s4 1983009808
        %v608 = vunpack.c.0.s8 %v607
        %v609 = vperm.slane %v601, %v608
        %v610 = vrot.slane %v593, 4
        %v611 = vsel %vm472, %v610, %v589
        %v612 = vrot.slane %v589, 4
        %v613 = vsel %vm472, %v593, %v612
        %v615 = vunpack.c.l.s4 1983009808
        %v616 = vunpack.c.0.s8 %v615
        %v617 = vperm.slane %v611, %v616
        %v619 = vunpack.c.l.s4 1983009808
        %v620 = vunpack.c.0.s8 %v619
        %v621 = vperm.slane %v613, %v620
        %v622 = vrot.slane %v617, 4
        %v623 = vsel %vm472, %v622, %v605
        %v624 = vrot.slane %v605, 4
        %v625 = vsel %vm472, %v617, %v624
        %v627 = vunpack.c.l.s4 1934713408
        %v628 = vunpack.c.0.s8 %v627
        %v629 = vperm.slane %v623, %v628
        %v631 = vunpack.c.l.s4 1934713408
        %v632 = vunpack.c.0.s8 %v631
        %v633 = vperm.slane %v625, %v632
        %v634 = vrot.slane %v621, 4
        %v635 = vsel %vm472, %v634, %v609
        %v636 = vrot.slane %v609, 4
        %v637 = vsel %vm472, %v621, %v636
        %v639 = vunpack.c.l.s4 1934713408
        %v640 = vunpack.c.0.s8 %v639
        %v641 = vperm.slane %v635, %v640
        %v643 = vunpack.c.l.s4 1934713408
        %v644 = vunpack.c.0.s8 %v643
        %v645 = vperm.slane %v637, %v644
        %v646 = vrot.slane %v629, 4
        %v647 = vsel %vm472, 0.0, %v646
        %v648 = vrot.slane %v633, 4
        %v649 = vsel %vm472, 0.0, %v648
        %v650 = vrot.slane %v641, 4
        %v651 = vsel %vm472, 0.0, %v650
        %v652 = vrot.slane %v645, 4
        %v653 = vsel %vm472, 0.0, %v652
        %v654 = vsel %vm472, %v648, %v629
        %v656 = vunpack.c.l.s4 1983009808
        %v657 = vunpack.c.0.s8 %v656
        %v658 = vperm.slane %v654, %v657
        %v659 = vrot.slane %v649, 4
        %v660 = vsel %vm472, %v659, %v647
        %v662 = vunpack.c.l.s4 1983009808
        %v663 = vunpack.c.0.s8 %v662
        %v664 = vperm.slane %v660, %v663
        %v665 = vsel %vm472, %v652, %v641
        %v667 = vunpack.c.l.s4 1983009808
        %v668 = vunpack.c.0.s8 %v667
        %v669 = vperm.slane %v665, %v668
        %v670 = vrot.slane %v653, 4
        %v671 = vsel %vm472, %v670, %v651
        %v673 = vunpack.c.l.s4 1983009808
        %v674 = vunpack.c.0.s8 %v673
        %v675 = vperm.slane %v671, %v674
        %v676 = vrot.slane %v664, 4
        %v677 = vsel %vm472, %v676, %v658
        %v678 = vrot.slane %v658, 4
        %v679 = vsel %vm472, %v664, %v678
        %v681 = vunpack.c.l.s4 1934713408
        %v682 = vunpack.c.0.s8 %v681
        %v683 = vperm.slane %v677, %v682
        %v685 = vunpack.c.l.s4 1934713408
        %v686 = vunpack.c.0.s8 %v685
        %v687 = vperm.slane %v679, %v686
        %v688 = vrot.slane %v675, 4
        %v689 = vsel %vm472, %v688, %v669
        %v690 = vrot.slane %v669, 4
        %v691 = vsel %vm472, %v675, %v690
        %v693 = vunpack.c.l.s4 1934713408
        %v694 = vunpack.c.0.s8 %v693
        %v695 = vperm.slane %v689, %v694
        %v697 = vunpack.c.l.s4 1934713408
        %v698 = vunpack.c.0.s8 %v697
        %v699 = vperm.slane %v691, %v698
        %v700 = vrot.slane %v695, 4
        %v701 = vsel %vm472, %v700, %v683
        %v702 = vrot.slane %v683, 4
        %v703 = vsel %vm472, %v695, %v702
        %v704 = vrot.slane %v699, 4
        %v705 = vsel %vm472, %v704, %v687
        %v706 = vrot.slane %v687, 4
        %v707 = vsel %vm472, %v699, %v706
        %v708 = vpack.c.bf16 %v701, %v701
        %v709 = vpack.c.bf16 %v703, %v703
        %v710 = vpack.c.bf16 %v705, %v705
        %v711 = vpack.c.bf16 %v707, %v707
        %712 = vrot.lane.b32.xlu0 %v458, 64
        %v713 = vpop.permute.xlu0 %712
        %714 = vrot.lane.b32.xlu0 %v463, 64
        %v715 = vpop.permute.xlu0 %714
        %716 = vrot.lane.b32.xlu0 %v466, 64
        %v717 = vpop.permute.xlu0 %716
        %718 = vrot.lane.b32.xlu0 %v469, 64
        %v719 = vpop.permute.xlu0 %718
        %v724 = vrot.slane %v717, 4
        %v725 = vsel %vm472, %v724, %v713
        %v726 = vrot.slane %v713, 4
        %v727 = vsel %vm472, %v717, %v726
        %v729 = vunpack.c.l.s4 1983009808
        %v730 = vunpack.c.0.s8 %v729
        %v731 = vperm.slane %v725, %v730
        %v733 = vunpack.c.l.s4 1983009808
        %v734 = vunpack.c.0.s8 %v733
        %v735 = vperm.slane %v727, %v734
        %v736 = vrot.slane %v719, 4
        %v737 = vsel %vm472, %v736, %v715
        %v738 = vrot.slane %v715, 4
        %v739 = vsel %vm472, %v719, %v738
        %v741 = vunpack.c.l.s4 1983009808
        %v742 = vunpack.c.0.s8 %v741
        %v743 = vperm.slane %v737, %v742
        %v745 = vunpack.c.l.s4 1983009808
        %v746 = vunpack.c.0.s8 %v745
        %v747 = vperm.slane %v739, %v746
        %v748 = vrot.slane %v743, 4
        %v749 = vsel %vm472, %v748, %v731
        %v750 = vrot.slane %v731, 4
        %v751 = vsel %vm472, %v743, %v750
        %v753 = vunpack.c.l.s4 1934713408
        %v754 = vunpack.c.0.s8 %v753
        %v755 = vperm.slane %v749, %v754
        %v757 = vunpack.c.l.s4 1934713408
        %v758 = vunpack.c.0.s8 %v757
        %v759 = vperm.slane %v751, %v758
        %v760 = vrot.slane %v747, 4
        %v761 = vsel %vm472, %v760, %v735
        %v762 = vrot.slane %v735, 4
        %v763 = vsel %vm472, %v747, %v762
        %v765 = vunpack.c.l.s4 1934713408
        %v766 = vunpack.c.0.s8 %v765
        %v767 = vperm.slane %v761, %v766
        %v769 = vunpack.c.l.s4 1934713408
        %v770 = vunpack.c.0.s8 %v769
        %v771 = vperm.slane %v763, %v770
        %v772 = vrot.slane %v755, 4
        %v773 = vsel %vm472, 0.0, %v772
        %v774 = vrot.slane %v759, 4
        %v775 = vsel %vm472, 0.0, %v774
        %v776 = vrot.slane %v767, 4
        %v777 = vsel %vm472, 0.0, %v776
        %v778 = vrot.slane %v771, 4
        %v779 = vsel %vm472, 0.0, %v778
        %v780 = vsel %vm472, %v774, %v755
        %v782 = vunpack.c.l.s4 1983009808
        %v783 = vunpack.c.0.s8 %v782
        %v784 = vperm.slane %v780, %v783
        %v785 = vrot.slane %v775, 4
        %v786 = vsel %vm472, %v785, %v773
        %v788 = vunpack.c.l.s4 1983009808
        %v789 = vunpack.c.0.s8 %v788
        %v790 = vperm.slane %v786, %v789
        %v791 = vsel %vm472, %v778, %v767
        %v793 = vunpack.c.l.s4 1983009808
        %v794 = vunpack.c.0.s8 %v793
        %v795 = vperm.slane %v791, %v794
        %v796 = vrot.slane %v779, 4
        %v797 = vsel %vm472, %v796, %v777
        %v799 = vunpack.c.l.s4 1983009808
        %v800 = vunpack.c.0.s8 %v799
        %v801 = vperm.slane %v797, %v800
        %v802 = vrot.slane %v790, 4
        %v803 = vsel %vm472, %v802, %v784
        %v804 = vrot.slane %v784, 4
        %v805 = vsel %vm472, %v790, %v804
        %v807 = vunpack.c.l.s4 1934713408
        %v808 = vunpack.c.0.s8 %v807
        %v809 = vperm.slane %v803, %v808
        %v811 = vunpack.c.l.s4 1934713408
        %v812 = vunpack.c.0.s8 %v811
        %v813 = vperm.slane %v805, %v812
        %v814 = vrot.slane %v801, 4
        %v815 = vsel %vm472, %v814, %v795
        %v816 = vrot.slane %v795, 4
        %v817 = vsel %vm472, %v801, %v816
        %v819 = vunpack.c.l.s4 1934713408
        %v820 = vunpack.c.0.s8 %v819
        %v821 = vperm.slane %v815, %v820
        %v823 = vunpack.c.l.s4 1934713408
        %v824 = vunpack.c.0.s8 %v823
        %v825 = vperm.slane %v817, %v824
        %v826 = vrot.slane %v821, 4
        %v827 = vsel %vm472, %v826, %v809
        %v828 = vrot.slane %v809, 4
        %v829 = vsel %vm472, %v821, %v828
        %v830 = vrot.slane %v825, 4
        %v831 = vsel %vm472, %v830, %v813
        %v832 = vrot.slane %v813, 4
        %v833 = vsel %vm472, %v825, %v832
        %v834 = vpack.c.bf16 %v827, %v827
        %v835 = vpack.c.bf16 %v829, %v829
        %v836 = vpack.c.bf16 %v831, %v831
        %v837 = vpack.c.bf16 %v833, %v833
        %vm838 = vcmask 64512
        %v840 = vsel %vm838, %v582, 0
        %v843 = vsel %vm838, %v708, 0
        %845 = vmatpush.bf16.xpose.msra.mxu0 0
        %846 = vmatpush.bf16.xpose.msra.mxu0 0
        %847 = vmatpush.bf16.xpose.msra.mxu0 0
        %848 = vmatpush.bf16.xpose.msra.mxu0 0
        %849 = vmatpush.bf16.xpose.msra.mxu0 0
        %850 = vmatpush.bf16.xpose.msra.mxu0 0
        %851 = vmatpush.bf16.xpose.msra.mxu0 0
        %852 = vmatpush.bf16.xpose.msra.mxu0 %v843
        %853 = vmatmul.bf16.gmra.mxu0 %v840
        %v854 = vpop.f32.mrf.mxu0
        %v855 = vadd.f32 0.0, %v854
        %v856 = vpop.f32.mrf.mxu0
        %857 = vdwg.mxu0
        %v859 = vsel %vm838, %v583, 0
        %v862 = vsel %vm838, %v709, 0
        %864 = vmatpush.bf16.xpose.msra.mxu0 0
        %865 = vmatpush.bf16.xpose.msra.mxu0 0
        %866 = vmatpush.bf16.xpose.msra.mxu0 0
        %867 = vmatpush.bf16.xpose.msra.mxu0 0
        %868 = vmatpush.bf16.xpose.msra.mxu0 0
        %869 = vmatpush.bf16.xpose.msra.mxu0 0
        %870 = vmatpush.bf16.xpose.msra.mxu0 0
        %871 = vmatpush.bf16.xpose.msra.mxu0 %v862
        %872 = vmatmul.bf16.gmra.mxu0 %v859
        %v873 = vpop.f32.mrf.mxu0
        %v874 = vadd.f32 0.0, %v873
        %v875 = vpop.f32.mrf.mxu0
        %876 = vdwg.mxu0
        %v878 = vsel %vm838, %v584, 0
        %v881 = vsel %vm838, %v710, 0
        %883 = vmatpush.bf16.xpose.msra.mxu0 0
        %884 = vmatpush.bf16.xpose.msra.mxu0 0
        %885 = vmatpush.bf16.xpose.msra.mxu0 0
        %886 = vmatpush.bf16.xpose.msra.mxu0 0
        %887 = vmatpush.bf16.xpose.msra.mxu0 0
        %888 = vmatpush.bf16.xpose.msra.mxu0 0
        %889 = vmatpush.bf16.xpose.msra.mxu0 0
        %890 = vmatpush.bf16.xpose.msra.mxu0 %v881
        %891 = vmatmul.bf16.gmra.mxu0 %v878
        %v892 = vpop.f32.mrf.mxu0
        %v893 = vadd.f32 0.0, %v892
        %v894 = vpop.f32.mrf.mxu0
        %895 = vdwg.mxu0
        %v897 = vsel %vm838, %v585, 0
        %v900 = vsel %vm838, %v711, 0
        %902 = vmatpush.bf16.xpose.msra.mxu0 0
        %903 = vmatpush.bf16.xpose.msra.mxu0 0
        %904 = vmatpush.bf16.xpose.msra.mxu0 0
        %905 = vmatpush.bf16.xpose.msra.mxu0 0
        %906 = vmatpush.bf16.xpose.msra.mxu0 0
        %907 = vmatpush.bf16.xpose.msra.mxu0 0
        %908 = vmatpush.bf16.xpose.msra.mxu0 0
        %909 = vmatpush.bf16.xpose.msra.mxu0 %v900
        %910 = vmatmul.bf16.gmra.mxu0 %v897
        %v911 = vpop.f32.mrf.mxu0
        %v912 = vadd.f32 0.0, %v911
        %v913 = vpop.f32.mrf.mxu0
        %914 = vdwg.mxu0
        %v915 = vsel %vm838, %v855, -inf
        %916 = vmax.xlane.f32.xlu0 %v915
        %v917 = vpop.xlane.xlu0 %916
        %v918 = vsel %vm838, %v874, -inf
        %919 = vmax.xlane.f32.xlu0 %v918
        %v920 = vpop.xlane.xlu0 %919
        %v921 = vsel %vm838, %v893, -inf
        %922 = vmax.xlane.f32.xlu0 %v921
        %v923 = vpop.xlane.xlu0 %922
        %v924 = vsel %vm838, %v912, -inf
        %925 = vmax.xlane.f32.xlu0 %v924
        %v926 = vpop.xlane.xlu0 %925
        %v927 = vsub.f32 %v855, %v917
        %v928 = vsub.f32 %v874, %v920
        %v929 = vsub.f32 %v893, %v923
        %v930 = vsub.f32 %v912, %v926
        %v931 = vmul.f32 %v927, 1.442695
        %v932 = vpow.pop %v931
        %v933 = vmul.f32 %v928, 1.442695
        %v934 = vpow.pop %v933
        %v935 = vmul.f32 %v929, 1.442695
        %v936 = vpow.pop %v935
        %v937 = vmul.f32 %v930, 1.442695
        %v938 = vpow.pop %v937
        %v939 = vsel %vm838, %v932, 0.0
        %940 = vadd.xlane.f32.xlu0 %v939
        %v941 = vpop.xlane.xlu0 %940
        %v942 = vsel %vm838, %v934, 0.0
        %943 = vadd.xlane.f32.xlu0 %v942
        %v944 = vpop.xlane.xlu0 %943
        %v945 = vsel %vm838, %v936, 0.0
        %946 = vadd.xlane.f32.xlu0 %v945
        %v947 = vpop.xlane.xlu0 %946
        %v948 = vsel %vm838, %v938, 0.0
        %949 = vadd.xlane.f32.xlu0 %v948
        %v950 = vpop.xlane.xlu0 %949
        %v951 = vrcp.pop %v941
        %v952 = vmul.f32 %v941, %v951
        %v953 = vsub.f32 1.0, %v952
        %v954 = vmul.f32 %v951, %v953
        %v955 = vadd.f32 %v951, %v954
        %vm956 = vweird.f32 %v941
        %vm957 = vweird.f32 %v951
        %vm958 = vmor %vm956, %vm957
        %v959 = vsel %vm958, %v951, %v955
        %v960 = vand.u32 2147483647, %v941
        %vm961 = vcmp.eq.f32.partialorder %v960, 8.507059e+37
        %v962 = vand.u32 %v941, 2147483648
        %v963 = vor.u32 1.1754944e-38, %v962
        %v964 = vsel %vm961, %v963, %v959
        %v965 = vmul.f32 %v932, %v964
        %v966 = vrcp.pop %v944
        %v967 = vmul.f32 %v944, %v966
        %v968 = vsub.f32 1.0, %v967
        %v969 = vmul.f32 %v966, %v968
        %v970 = vadd.f32 %v966, %v969
        %vm971 = vweird.f32 %v944
        %vm972 = vweird.f32 %v966
        %vm973 = vmor %vm971, %vm972
        %v974 = vsel %vm973, %v966, %v970
        %v975 = vand.u32 2147483647, %v944
        %vm976 = vcmp.eq.f32.partialorder %v975, 8.507059e+37
        %v977 = vand.u32 %v944, 2147483648
        %v978 = vor.u32 1.1754944e-38, %v977
        %v979 = vsel %vm976, %v978, %v974
        %v980 = vmul.f32 %v934, %v979
        %v981 = vrcp.pop %v947
        %v982 = vmul.f32 %v947, %v981
        %v983 = vsub.f32 1.0, %v982
        %v984 = vmul.f32 %v981, %v983
        %v985 = vadd.f32 %v981, %v984
        %vm986 = vweird.f32 %v947
        %vm987 = vweird.f32 %v981
        %vm988 = vmor %vm986, %vm987
        %v989 = vsel %vm988, %v981, %v985
        %v990 = vand.u32 2147483647, %v947
        %vm991 = vcmp.eq.f32.partialorder %v990, 8.507059e+37
        %v992 = vand.u32 %v947, 2147483648
        %v993 = vor.u32 1.1754944e-38, %v992
        %v994 = vsel %vm991, %v993, %v989
        %v995 = vmul.f32 %v936, %v994
        %v996 = vrcp.pop %v950
        %v997 = vmul.f32 %v950, %v996
        %v998 = vsub.f32 1.0, %v997
        %v999 = vmul.f32 %v996, %v998
        %v1000 = vadd.f32 %v996, %v999
        %vm1001 = vweird.f32 %v950
        %vm1002 = vweird.f32 %v996
        %vm1003 = vmor %vm1001, %vm1002
        %v1004 = vsel %vm1003, %v996, %v1000
        %v1005 = vand.u32 2147483647, %v950
        %vm1006 = vcmp.eq.f32.partialorder %v1005, 8.507059e+37
        %v1007 = vand.u32 %v950, 2147483648
        %v1008 = vor.u32 1.1754944e-38, %v1007
        %v1009 = vsel %vm1006, %v1008, %v1004
        %v1010 = vmul.f32 %v938, %v1009
        %v1011 = vpack.c.bf16 %v965, %v965
        %v1012 = vpack.c.bf16 %v980, %v980
        %v1013 = vpack.c.bf16 %v995, %v995
        %v1014 = vpack.c.bf16 %v1010, %v1010
        %v1016 = vsel %vm838, %v1011, 0
        %vm1018 = vcmask 1043456
        %v1020 = vsel %vm1018, %v834, 0
        %1022 = vmatpush.bf16.msra.mxu0 0
        %1023 = vmatpush.bf16.msra.mxu0 0
        %1024 = vmatpush.bf16.msra.mxu0 0
        %1025 = vmatpush.bf16.msra.mxu0 0
        %1026 = vmatpush.bf16.msra.mxu0 0
        %1027 = vmatpush.bf16.msra.mxu0 0
        %1028 = vmatpush.bf16.msra.mxu0 0
        %1029 = vmatpush.bf16.msra.mxu0 %v1020
        %1030 = vmatmul.bf16.gmra.mxu0 %v1016
        %v1031 = vpop.f32.mrf.mxu0
        %v1032 = vadd.f32 0.0, %v1031
        %v1033 = vpop.f32.mrf.mxu0
        %1034 = vdwg.mxu0
        %v1036 = vsel %vm838, %v1012, 0
        %v1039 = vsel %vm1018, %v835, 0
        %1041 = vmatpush.bf16.msra.mxu0 0
        %1042 = vmatpush.bf16.msra.mxu0 0
        %1043 = vmatpush.bf16.msra.mxu0 0
        %1044 = vmatpush.bf16.msra.mxu0 0
        %1045 = vmatpush.bf16.msra.mxu0 0
        %1046 = vmatpush.bf16.msra.mxu0 0
        %1047 = vmatpush.bf16.msra.mxu0 0
        %1048 = vmatpush.bf16.msra.mxu0 %v1039
        %1049 = vmatmul.bf16.gmra.mxu0 %v1036
        %v1050 = vpop.f32.mrf.mxu0
        %v1051 = vadd.f32 0.0, %v1050
        %v1052 = vpop.f32.mrf.mxu0
        %1053 = vdwg.mxu0
        %v1055 = vsel %vm838, %v1013, 0
        %v1058 = vsel %vm1018, %v836, 0
        %1060 = vmatpush.bf16.msra.mxu0 0
        %1061 = vmatpush.bf16.msra.mxu0 0
        %1062 = vmatpush.bf16.msra.mxu0 0
        %1063 = vmatpush.bf16.msra.mxu0 0
        %1064 = vmatpush.bf16.msra.mxu0 0
        %1065 = vmatpush.bf16.msra.mxu0 0
        %1066 = vmatpush.bf16.msra.mxu0 0
        %1067 = vmatpush.bf16.msra.mxu0 %v1058
        %1068 = vmatmul.bf16.gmra.mxu0 %v1055
        %v1069 = vpop.f32.mrf.mxu0
        %v1070 = vadd.f32 0.0, %v1069
        %v1071 = vpop.f32.mrf.mxu0
        %1072 = vdwg.mxu0
        %v1074 = vsel %vm838, %v1014, 0
        %v1077 = vsel %vm1018, %v837, 0
        %1079 = vmatpush.bf16.msra.mxu0 0
        %1080 = vmatpush.bf16.msra.mxu0 0
        %1081 = vmatpush.bf16.msra.mxu0 0
        %1082 = vmatpush.bf16.msra.mxu0 0
        %1083 = vmatpush.bf16.msra.mxu0 0
        %1084 = vmatpush.bf16.msra.mxu0 0
        %1085 = vmatpush.bf16.msra.mxu0 0
        %1086 = vmatpush.bf16.msra.mxu0 %v1077
        %1087 = vmatmul.bf16.gmra.mxu0 %v1074
        %v1088 = vpop.f32.mrf.mxu0
        %v1089 = vadd.f32 0.0, %v1088
        %v1090 = vpop.f32.mrf.mxu0
        %1091 = vdwg.mxu0
        %v1092 = vrot.slane %v1070, 4
        %v1093 = vsel %vm472, %v1092, %v1032
        %v1094 = vrot.slane %v1032, 4
        %v1095 = vsel %vm472, %v1070, %v1094
        %v1097 = vunpack.c.l.s4 1983009808
        %v1098 = vunpack.c.0.s8 %v1097
        %v1099 = vperm.slane %v1093, %v1098
        %v1101 = vunpack.c.l.s4 1983009808
        %v1102 = vunpack.c.0.s8 %v1101
        %v1103 = vperm.slane %v1095, %v1102
        %v1104 = vrot.slane %v1089, 4
        %v1105 = vsel %vm472, %v1104, %v1051
        %v1106 = vrot.slane %v1051, 4
        %v1107 = vsel %vm472, %v1089, %v1106
        %v1109 = vunpack.c.l.s4 1983009808
        %v1110 = vunpack.c.0.s8 %v1109
        %v1111 = vperm.slane %v1105, %v1110
        %v1113 = vunpack.c.l.s4 1983009808
        %v1114 = vunpack.c.0.s8 %v1113
        %v1115 = vperm.slane %v1107, %v1114
        %v1116 = vrot.slane %v1111, 4
        %v1117 = vsel %vm472, %v1116, %v1099
        %v1118 = vrot.slane %v1099, 4
        %v1119 = vsel %vm472, %v1111, %v1118
        %v1121 = vunpack.c.l.s4 1934713408
        %v1122 = vunpack.c.0.s8 %v1121
        %v1123 = vperm.slane %v1117, %v1122
        %v1125 = vunpack.c.l.s4 1934713408
        %v1126 = vunpack.c.0.s8 %v1125
        %v1127 = vperm.slane %v1119, %v1126
        %v1128 = vrot.slane %v1115, 4
        %v1129 = vsel %vm472, %v1128, %v1103
        %v1130 = vrot.slane %v1103, 4
        %v1131 = vsel %vm472, %v1115, %v1130
        %v1133 = vunpack.c.l.s4 1934713408
        %v1134 = vunpack.c.0.s8 %v1133
        %v1135 = vperm.slane %v1129, %v1134
        %v1137 = vunpack.c.l.s4 1934713408
        %v1138 = vunpack.c.0.s8 %v1137
        %v1139 = vperm.slane %v1131, %v1138
        %v1140 = vrot.slane %v1123, 4
        %v1141 = vsel %vm472, 0.0, %v1140
        %v1142 = vrot.slane %v1127, 4
        %v1143 = vsel %vm472, 0.0, %v1142
        %v1144 = vrot.slane %v1135, 4
        %v1145 = vsel %vm472, 0.0, %v1144
        %v1146 = vrot.slane %v1139, 4
        %v1147 = vsel %vm472, 0.0, %v1146
        %v1148 = vsel %vm472, %v1142, %v1123
        %v1150 = vunpack.c.l.s4 1983009808
        %v1151 = vunpack.c.0.s8 %v1150
        %v1152 = vperm.slane %v1148, %v1151
        %v1153 = vrot.slane %v1143, 4
        %v1154 = vsel %vm472, %v1153, %v1141
        %v1156 = vunpack.c.l.s4 1983009808
        %v1157 = vunpack.c.0.s8 %v1156
        %v1158 = vperm.slane %v1154, %v1157
        %v1159 = vsel %vm472, %v1146, %v1135
        %v1161 = vunpack.c.l.s4 1983009808
        %v1162 = vunpack.c.0.s8 %v1161
        %v1163 = vperm.slane %v1159, %v1162
        %v1164 = vrot.slane %v1147, 4
        %v1165 = vsel %vm472, %v1164, %v1145
        %v1167 = vunpack.c.l.s4 1983009808
        %v1168 = vunpack.c.0.s8 %v1167
        %v1169 = vperm.slane %v1165, %v1168
        %v1170 = vrot.slane %v1158, 4
        %v1171 = vsel %vm472, %v1170, %v1152
        %v1172 = vrot.slane %v1152, 4
        %v1173 = vsel %vm472, %v1158, %v1172
        %v1175 = vunpack.c.l.s4 1934713408
        %v1176 = vunpack.c.0.s8 %v1175
        %v1177 = vperm.slane %v1171, %v1176
        %v1179 = vunpack.c.l.s4 1934713408
        %v1180 = vunpack.c.0.s8 %v1179
        %v1181 = vperm.slane %v1173, %v1180
        %v1182 = vrot.slane %v1169, 4
        %v1183 = vsel %vm472, %v1182, %v1163
        %v1184 = vrot.slane %v1163, 4
        %v1185 = vsel %vm472, %v1169, %v1184
        %v1187 = vunpack.c.l.s4 1934713408
        %v1188 = vunpack.c.0.s8 %v1187
        %v1189 = vperm.slane %v1183, %v1188
        %v1191 = vunpack.c.l.s4 1934713408
        %v1192 = vunpack.c.0.s8 %v1191
        %v1193 = vperm.slane %v1185, %v1192
        %v1194 = vrot.slane %v1189, 4
        %v1195 = vsel %vm472, %v1194, %v1177
        %v1196 = vrot.slane %v1177, 4
        %v1197 = vsel %vm472, %v1189, %v1196
        %v1198 = vrot.slane %v1193, 4
        %v1199 = vsel %vm472, %v1198, %v1181
        %v1200 = vrot.slane %v1181, 4
        %v1201 = vsel %vm472, %v1193, %v1200
        %1203 = vrot.lane.b32.xlu0 %v1197, 8
        %v1204 = vpop.permute.xlu0 %1203
        %1207 = vrot.lane.b32.xlu0 %v1199, 16
        %v1208 = vpop.permute.xlu0 %1207
        %1211 = vrot.lane.b32.xlu0 %v1201, 24
        %v1212 = vpop.permute.xlu0 %1211
        %v1214 = vsel %vm838, %v1195, %v1204
        %vm1215 = vcmask 130048
        %v1216 = vsel %vm1215, %v1214, %v1208
        %vm1217 = vcmask 195584
        %v1218 = vsel %vm1217, %v1216, %v1212
        %v1219 = vsel %vm838, %v965, 0.0
        %v1220 = vsel %vm838, %v980, 0.0
        %v1221 = vadd.f32 %v1219, %v1220
        %v1222 = vsel %vm838, %v995, 0.0
        %v1223 = vadd.f32 %v1221, %v1222
        %v1224 = vsel %vm838, %v1010, 0.0
        %v1225 = vadd.f32 %v1223, %v1224
        %v1226 = vrcp.pop 4.0
        %v1227 = vmul.f32 4.0, %v1226
        %v1228 = vsub.f32 1.0, %v1227
        %v1229 = vmul.f32 %v1226, %v1228
        %v1230 = vadd.f32 %v1226, %v1229
        %vm1231 = vweird.f32 %v1226
        %v1232 = vsel %vm1231, %v1226, %v1230
        %v1233 = vmul.f32 %v1225, %v1232
        %v1234 = vpack.c.bf16 %v1218, %v1218
        %v1235 = vld [vmem:[#allocation8] sm:$0xf]
        %v1236 = vld [vmem:[#allocation8 + $0x4] sm:$0xf]
        %v1237 = vld [vmem:[#allocation8 + $0x8] sm:$0xf]
        %v1238 = vld [vmem:[#allocation8 + $0xc] sm:$0xf]
        %v1239 = vld [vmem:[%s6] sm:$0x1]
        %v1241 = vperm.slane %v1239, 0
        %v1247 = vunpack.c.l.b16 %v1235
        %v1248 = vunpack.c.l.b16 %v1236
        %v1249 = vunpack.c.l.b16 %v1237
        %v1250 = vunpack.c.l.b16 %v1238
        %v1251 = vpack.c.b16 %v1248, %v1247
        %v1252 = vpack.c.b16 %v1250, %v1249
        %v1256 = vsel %vm386, %v1234, 0
        %1258 = vmatpush.bf16.msra.mxu0 0
        %1259 = vmatpush.bf16.msra.mxu0 0
        %1260 = vmatpush.bf16.msra.mxu0 0
        %1261 = vmatpush.bf16.msra.mxu0 0
        %1262 = vmatpush.bf16.msra.mxu0 0
        %1263 = vmatpush.bf16.msra.mxu0 0
        %1264 = vmatpush.bf16.msra.mxu0 %v1252
        %1265 = vmatpush.bf16.msra.mxu0 %v1251
        %1266 = vmatmul.bf16.gmra.mxu0 %v1256
        %v1267 = vpop.f32.mrf.mxu0
        %v1268 = vadd.f32 %v1241, %v1267
        %v1269 = vpop.f32.mrf.mxu0
        %1270 = vdwg.mxu0
        %v1271 = vadd.f32 %v383, %v1268
        %v1272 = vpack.c.bf16 %v1271, %v1271
        %vm1273 = vcmask 257024
        %1274 = vst.msk [vmem:[%s374] sm:$0xf] %vm1273, %v1272
        %1275 = vst.msk [vmem:[%s381] sm:$0xff] %vm838, %v1233
        %s1276 = sand.u32 %s191, 1
        %s1277 = scalar_lea.sflag [#allocation4], %s1276
        %s1278 = sand.u32 %s191, 1
        %s1279 = smul.addr %s1278, 4
        %s1280 = scalar_lea.vmem [#allocation10], %s1279
        %s1281 = sand.u32 %s217, 1
        %s1282 = scalar_lea.sflag [#allocation12], %s1281
        %s1283 = sand.u32 %s217, 1
        %s1284 = smul.addr %s1283, 8
        %s1285 = scalar_lea.vmem [#allocation11], %s1284
        // Predicated region
        $region65: #{tpu_custom_call.1} parent=47 // pred_check
          %p1286 = pneg %p201
        $region66: #{tpu_custom_call.1} parent=47 // pred_check_branch
          %1288 = sbr.rel (%p1286) target = $region68
        $region67: #{tpu_custom_call.1} parent=47 // pred_region
          %1290 = vsyncadd %s1277, 0
          %s1291 = smul.addr %s31, 4
          %s1292 = scalar_lea.hbm %s7, %s1291
          %s1294 = sshll.u32 %s1280, 4
          %s1295 = int_to_ptr.vmem [resolvable:$true] %s1294
          %s1296 = sshll.u32 %s1292, 4
          %s1297 = int_to_ptr.hbm [resolvable:$true] %s1296
          %1299 = dma.vmem_to_hbm [thread:$0]  %s1295, 64, %s1297, %s1277
        $region68: #{tpu_custom_call.1} parent=47 // pred_fallthru
          _
        // Predicated region
        $region69: #{tpu_custom_call.1} parent=47 // pred_check
          %p1300 = pneg %p227
        $region70: #{tpu_custom_call.1} parent=47 // pred_check_branch
          %1302 = sbr.rel (%p1300) target = $region72
        $region71: #{tpu_custom_call.1} parent=47 // pred_region
          %1304 = vsyncadd %s1282, 0
          %s1305 = smul.addr %s31, 8
          %s1306 = scalar_lea.hbm %s8, %s1305
          %s1308 = sshll.u32 %s1285, 4
          %s1309 = int_to_ptr.vmem [resolvable:$true] %s1308
          %s1310 = sshll.u32 %s1306, 4
          %s1311 = int_to_ptr.hbm [resolvable:$true] %s1310
          %1313 = dma.vmem_to_hbm [thread:$0]  %s1309, 128, %s1311, %s1282
        $region72: #{tpu_custom_call.1} parent=47 // pred_fallthru
          _
      $region48: #{tpu_custom_call.1} parent=5 // pred_fallthru
        _
      %p1314 = scmp.le.s32.totalorder 2, %s26
      // Predicated region
      $region73: #{tpu_custom_call.1} parent=5 // pred_check
        %p1315 = pneg %p1314
      $region74: #{tpu_custom_call.1} parent=5 // pred_check_branch
        %1317 = sbr.rel (%p1315) target = $region76
      $region75: #{tpu_custom_call.1} parent=5 // pred_region
        %s1318 = ssub.s32 %s26, 2
        // Predicated region
        $region77: #{tpu_custom_call.1} parent=75 // pred_check
          %p1319 = pneg %p207
        $region78: #{tpu_custom_call.1} parent=75 // pred_check_branch
          %1321 = sbr.rel (%p1319) target = $region80
        $region79: #{tpu_custom_call.1} parent=75 // pred_region
          %s1322 = sand.u32 %s192, 1
          %s1323 = scalar_lea.sflag [#allocation4], %s1322
          %s1324 = sand.u32 %s192, 1
          %s1325 = smul.addr %s1324, 4
          %s1326 = scalar_lea.vmem [#allocation10], %s1325
          %1328 = dma.done %s1323, 64
        $region80: #{tpu_custom_call.1} parent=75 // pred_fallthru
          _
        // Predicated region
        $region81: #{tpu_custom_call.1} parent=75 // pred_check
          %p1329 = pneg %p233
        $region82: #{tpu_custom_call.1} parent=75 // pred_check_branch
          %1331 = sbr.rel (%p1329) target = $region84
        $region83: #{tpu_custom_call.1} parent=75 // pred_region
          %s1332 = sand.u32 %s218, 1
          %s1333 = scalar_lea.sflag [#allocation12], %s1332
          %s1334 = sand.u32 %s218, 1
          %s1335 = smul.addr %s1334, 8
          %s1336 = scalar_lea.vmem [#allocation11], %s1335
          %1338 = dma.done %s1333, 128
        $region84: #{tpu_custom_call.1} parent=75 // pred_fallthru
          _
      $region76: #{tpu_custom_call.1} parent=5 // pred_fallthru
        _
    $region6: #{tpu_custom_call.1} parent=1 // loop_footer
      %s30 = sadd.s32 1, %s26
    $region7: #{tpu_custom_call.1} parent=1 // loop_footer_branch
      %25 = sbr.rel target = $region3
    $region8: #{tpu_custom_call.1} parent=1 // loop_exit
      _
    %1339 = vsyncpa [#allocation3], 1
    %s1340 = scalar_lea.sflag [#allocation3], 1
    %1341 = vsyncpa %s1340, 1
    %1342 = vsyncpa [#allocation6], 1
    %1343 = vsyncpa [#allocation9], 1
    %1344 = vsyncpa [#allocation4], 1
    %s1345 = scalar_lea.sflag [#allocation4], 1
    %1346 = vsyncpa %s1345, 1
    %1347 = vsyncpa [#allocation12], 1
    %s1348 = scalar_lea.sflag [#allocation12], 1
    %1349 = vsyncpa %s1348, 1

</llo_original>
